<compile_context>
chip_gen: v7x
topology: tpu7x:2x2x1
jax: 0.10.0
libtpu: 0.0.40
codegen_flags: <defaults>
</compile_context>

<pallas_src>
import functools

import jax
import jax.numpy as jnp
from jax.experimental import pallas as pl
from jax.experimental.pallas import tpu as pltpu


DEFAULT_TM = 512      # destination-node (output row) tile
DEFAULT_TK = 2048     # source-node (reduction) tile


def _round_up(v: int, m: int) -> int:
    return (v + m - 1) // m * m


def _effective_tiles(n: int, tm: int, tk: int):
    """Clamp tile sizes for small graphs so padding stays modest."""
    cap = _round_up(max(n, 256), 256)
    return min(tm, cap), min(tk, cap)


def prepare_adjacency(adj, *, tm=DEFAULT_TM, tk=DEFAULT_TK):
    """One-time per-graph preprocessing (kept OUT of the per-layer hot path).

    Stores A as int8 (exact for a 0/1 adjacency) zero-padded to tile multiples.
    adj[i, j] = 1 iff edge j -> i.
    """
    n = adj.shape[0]
    tm, tk = _effective_tiles(n, tm, tk)
    n_p, k_p = _round_up(n, tm), _round_up(n, tk)
    return jnp.zeros((n_p, k_p), jnp.int8).at[:n, :n].set(adj.astype(jnp.int8))


# ---------------------------------------------------------------------------
# Kernels
# ---------------------------------------------------------------------------

def _agg_bias_act_kernel(a_ref, xw_ref, b_ref, o_ref, acc_ref, *,
                         tk, xw_resident, apply_relu):
    """Reassociated path: out = act(A @ (X W^T) + b). Hot loop is a single matmul."""
    k = pl.program_id(1)

    @pl.when(k == 0)
    def _init():
        acc_ref[...] = jnp.zeros_like(acc_ref)

    if xw_resident:
        start = pl.multiple_of(k * tk, tk)
        xw = xw_ref[pl.ds(start, tk), :]
    else:
        xw = xw_ref[...]

    # int8 adjacency upcast to bf16 right before the MXU dot (cast hides under DMA).
    acc_ref[...] += jnp.dot(a_ref[...].astype(jnp.bfloat16), xw,
                            preferred_element_type=jnp.float32)

    @pl.when(k == pl.num_programs(1) - 1)
    def _finalize():
        out = acc_ref[...] + b_ref[...]
        if apply_relu:
            out = jnp.maximum(out, 0.0)
        o_ref[...] = out.astype(o_ref.dtype)


def _agg_linear_kernel(a_ref, x_ref, w_ref, b_ref, o_ref, acc_ref, *, apply_relu):
    """Aggregate-then-linear path (used when out_feats > in_feats)."""
    k = pl.program_id(1)

    @pl.when(k == 0)
    def _init():
        acc_ref[...] = jnp.zeros_like(acc_ref)

    acc_ref[...] += jnp.dot(a_ref[...].astype(jnp.bfloat16), x_ref[...],
                            preferred_element_type=jnp.float32)

    @pl.when(k == pl.num_programs(1) - 1)
    def _finalize():
        # bf16 x bf16 with f32 accumulate: native MXU rate (no multi-pass f32 path).
        out = jnp.dot(acc_ref[...].astype(jnp.bfloat16), w_ref[...],
                      preferred_element_type=jnp.float32) + b_ref[...]
        if apply_relu:
            out = jnp.maximum(out, 0.0)
        o_ref[...] = out.astype(o_ref.dtype)


# ---------------------------------------------------------------------------
# Wrapper
# ---------------------------------------------------------------------------

def gcn_node_apply_forward(adj_p, x, w, b, *, activation=None,
                           tm=DEFAULT_TM, tk=DEFAULT_TK):
    """adj_p: int8 adjacency from prepare_adjacency() (padded to tile multiples).
       x:     (N, in_feats) node features.
       w:     (out_feats, in_feats) Linear weight (PyTorch convention).
       b:     (out_feats,) Linear bias.
       activation: None or "relu".
       returns: (N, out_feats) float32.
    """
    if activation not in (None, "relu"):
        raise ValueError(f"unsupported activation: {activation}")
    apply_relu = activation == "relu"

    n, in_feats = x.shape
    out_feats = w.shape[0]
    tm, tk = _effective_tiles(n, tm, tk)
    n_p, k_p = adj_p.shape
    assert n_p % tm == 0 and k_p % tk == 0 and n_p >= n and k_p >= n, (
        "adjacency must be prepared with prepare_adjacency() using the same tm/tk")

    in_p = _round_up(in_feats, 128)    # feature lanes
    out_p = _round_up(out_feats, 128)  # output lanes (lane-dense stores)

    b_p = jnp.zeros((1, out_p), jnp.float32).at[0, :out_feats].set(b.astype(jnp.float32))
    grid = (n_p // tm, k_p // tk)

    reassociate = out_p <= in_p
    if reassociate:
        # Precompute XW = X @ W.T once (tiny N x out matmul), aggregate A @ XW in-kernel.
        xw = jnp.dot(x.astype(jnp.bfloat16), w.T.astype(jnp.bfloat16),
                     preferred_element_type=jnp.float32).astype(jnp.bfloat16)
        xw_p = jnp.zeros((k_p, out_p), jnp.bfloat16).at[:n, :out_feats].set(xw)

        # Keep XW fully VMEM-resident (DMA'd once) when it is small enough.
        xw_resident = k_p * out_p * 2 <= 8 * 1024 * 1024
        xw_spec = (pl.BlockSpec((k_p, out_p), lambda i, k: (0, 0)) if xw_resident
                   else pl.BlockSpec((tk, out_p), lambda i, k: (k, 0)))

        kernel = functools.partial(_agg_bias_act_kernel, tk=tk,
                                   xw_resident=xw_resident, apply_relu=apply_relu)
        in_specs = [
            pl.BlockSpec((tm, tk), lambda i, k: (i, k)),        # A tile (int8)
            xw_spec,                                            # XW (bf16)
            pl.BlockSpec((1, out_p), lambda i, k: (0, 0)),      # bias (resident)
        ]
        operands = (adj_p, xw_p, b_p)
        acc_shape = (tm, out_p)

        flops = 2 * n_p * k_p * out_p
        xw_bytes = k_p * out_p * 2 if xw_resident else (n_p // tm) * k_p * out_p * 2
        bytes_accessed = n_p * k_p * 1 + xw_bytes + out_p * 4 + n_p * out_p * 4
        vmem_need = (2 * tm * tk * 1
                     + (k_p * out_p * 2 if xw_resident else 2 * tk * out_p * 2)
                     + 2 * tm * out_p * 4 + tm * out_p * 4 + out_p * 4)
    else:
        x_p = jnp.zeros((k_p, in_p), jnp.bfloat16).at[:n, :in_feats].set(
            x.astype(jnp.bfloat16))
        w_p = jnp.zeros((in_p, out_p), jnp.bfloat16).at[:in_feats, :out_feats].set(
            w.T.astype(jnp.bfloat16))

        kernel = functools.partial(_agg_linear_kernel, apply_relu=apply_relu)
        in_specs = [
            pl.BlockSpec((tm, tk), lambda i, k: (i, k)),        # A tile (int8)
            pl.BlockSpec((tk, in_p), lambda i, k: (k, 0)),      # X tile (bf16)
            pl.BlockSpec((in_p, out_p), lambda i, k: (0, 0)),   # W (resident, bf16)
            pl.BlockSpec((1, out_p), lambda i, k: (0, 0)),      # bias (resident)
        ]
        operands = (adj_p, x_p, w_p, b_p)
        acc_shape = (tm, in_p)

        flops = 2 * n_p * k_p * in_p + 2 * n_p * in_p * out_p
        bytes_accessed = (n_p * k_p * 1 + (n_p // tm) * k_p * in_p * 2
                          + in_p * out_p * 2 + out_p * 4 + n_p * out_p * 4)
        vmem_need = (2 * tm * tk * 1 + 2 * tk * in_p * 2 + in_p * out_p * 2
                     + 2 * tm * out_p * 4 + tm * in_p * 4 + out_p * 4)

    # Budget VMEM from the actual tile footprint; cap at 64 MiB so v7x is safe too.
    vmem_limit = min(max(vmem_need + (8 << 20), 32 << 20), 64 << 20)

    out_padded = pl.pallas_call(
        kernel,
        out_shape=jax.ShapeDtypeStruct((n_p, out_p), jnp.float32),
        grid_spec=pltpu.PrefetchScalarGridSpec(
            num_scalar_prefetch=0,
            grid=grid,
            in_specs=in_specs,
            out_specs=pl.BlockSpec((tm, out_p), lambda i, k: (i, 0)),
            scratch_shapes=[pltpu.VMEM(acc_shape, jnp.float32)],
        ),
        compiler_params=pltpu.CompilerParams(
            dimension_semantics=("parallel", "arbitrary"),
            vmem_limit_bytes=vmem_limit,
        ),
        cost_estimate=pl.CostEstimate(flops=flops, transcendentals=0,
                                      bytes_accessed=bytes_accessed),
    )(*operands)

    return out_padded[:n, :out_feats]


# ---------------------------------------------------------------------------
# Demo / correctness check
# ---------------------------------------------------------------------------

if __name__ == "__main__":
    key = jax.random.PRNGKey(0)
    k_adj, k_x, k_w, k_b, k_w2, k_b2 = jax.random.split(key, 6)

    # Small synthetic graph; exercises row/reduction padding (300 -> 512) and lane
    # padding (16 -> 128, 32 -> 128).
    n_nodes, in_feats, out_feats = 300, 16, 32

    adj = (jax.random.uniform(k_adj, (n_nodes, n_nodes)) < 0.2).astype(jnp.float32)
    x = jax.random.normal(k_x, (n_nodes, in_feats), dtype=jnp.float32)
    bound = 1.0 / (in_feats ** 0.5)
    w = jax.random.uniform(k_w, (out_feats, in_feats), minval=-bound, maxval=bound,
                           dtype=jnp.float32)
    b = jax.random.uniform(k_b, (out_feats,), minval=-bound, maxval=bound,
                           dtype=jnp.float32)

    # One-time graph preprocessing (int8 adjacency, padded) -- outside the hot path.
    adj_p = jax.block_until_ready(prepare_adjacency(adj))

    fwd = jax.jit(gcn_node_apply_forward, static_argnames=("activation", "tm", "tk"))
    hp = jax.lax.Precision.HIGHEST

    def ref_reassoc(act_name):
        # Mimic the kernel's bf16 streaming of XW (0/1 adjacency is exact in int8/bf16).
        xw = jnp.dot(x.astype(jnp.bfloat16), w.T.astype(jnp.bfloat16),
                     preferred_element_type=jnp.float32)
        xw = xw.astype(jnp.bfloat16).astype(jnp.float32)
        h = jnp.dot(adj, xw, precision=hp) + b
        return jnp.maximum(h, 0.0) if act_name == "relu" else h

    ok = True
    for act_name in (None, "relu"):
        out = jax.block_until_ready(fwd(adj_p, x, w, b, activation=act_name))
        ref = ref_reassoc(act_name)
        assert out.shape == (n_nodes, out_feats)
        if not jnp.allclose(out, ref, atol=2e-2, rtol=2e-2):
            ok = False
            print(f"mismatch (reassociated, activation={act_name}): "
                  f"max_abs_err={float(jnp.max(jnp.abs(out - ref))):.4e}")

    # Second weight shape exercises the aggregate-then-linear kernel (out > in).
    out_feats2 = 200
    w2 = jax.random.uniform(k_w2, (out_feats2, in_feats), minval=-bound, maxval=bound,
                            dtype=jnp.float32)
    b2 = jax.random.uniform(k_b2, (out_feats2,), minval=-bound, maxval=bound,
                            dtype=jnp.float32)

    def ref_agg_linear(act_name):
        x_bf = x.astype(jnp.bfloat16).astype(jnp.float32)
        agg = jnp.dot(adj, x_bf, precision=hp)
        agg_bf = agg.astype(jnp.bfloat16).astype(jnp.float32)
        w_bf = w2.astype(jnp.bfloat16).astype(jnp.float32)
        h = jnp.dot(agg_bf, w_bf.T, precision=hp) + b2
        return jnp.maximum(h, 0.0) if act_name == "relu" else h

    out2 = jax.block_until_ready(fwd(adj_p, x, w2, b2, activation="relu"))
    ref2 = ref_agg_linear("relu")
    assert out2.shape == (n_nodes, out_feats2)
    if not jnp.allclose(out2, ref2, atol=3e-2, rtol=3e-2):
        ok = False
        print(f"mismatch (agg-then-linear): "
              f"max_abs_err={float(jnp.max(jnp.abs(out2 - ref2))):.4e}")

    assert ok, "kernel output mismatch vs reference"
    print("KERNEL_OK")
</pallas_src>

<mosaic_0001>
module attributes {stable_mosaic.version = 11 : i64} {
  func.func @_agg_bias_act_kernel(%arg0: i32, %arg1: i32, %arg2: memref<512x512xi8, #tpu.memory_space<vmem>>, %arg3: memref<512x128xbf16, #tpu.memory_space<vmem>>, %arg4: memref<1x128xf32, #tpu.memory_space<vmem>>, %arg5: memref<512x128xf32, #tpu.memory_space<vmem>>, %arg6: memref<512x128xf32, #tpu.memory_space<vmem>>) attributes {dimension_semantics = [#tpu.dimension_semantics<parallel>, #tpu.dimension_semantics<arbitrary>], iteration_bounds = array<i64: 1, 1>, scalar_prefetch = 0 : i64, scratch_operands = 1 : i64, tpu.core_type = #tpu.core_type<tc>, window_params = [{transform_indices = @transform_0, window_bounds = array<i64: 512, 512>}, {pipeline_mode = #tpu.pipeline_mode<synchronous>, transform_indices = @transform_1, window_bounds = array<i64: 512, 128>}, {pipeline_mode = #tpu.pipeline_mode<synchronous>, transform_indices = @transform_2, window_bounds = array<i64: 1, 128>}, {transform_indices = @transform_3, window_bounds = array<i64: 512, 128>}]} {
    %c0_i32 = arith.constant 0 : i32
    %0 = arith.cmpi eq, %arg1, %c0_i32 : i32
    %1 = arith.extui %0 : i1 to i32
    %c0_i32_0 = arith.constant 0 : i32
    %2 = arith.cmpi ne, %1, %c0_i32_0 : i32
    scf.if %2 {
      %cst_9 = arith.constant 0.000000e+00 : f32
      %16 = vector.broadcast %cst_9 : f32 to vector<512x128xf32>
      %c0_10 = arith.constant 0 : index
      %c0_11 = arith.constant 0 : index
      %17 = vector.load %arg6[%c0_10, %c0_11] : memref<512x128xf32, #tpu.memory_space<vmem>>, vector<512x128xf32>
      tpu.vector_store %arg6[%c0_10, %c0_11], %16 {strides = array<i32>} : memref<512x128xf32, #tpu.memory_space<vmem>>, vector<512x128xf32>,
    } else {
    }
    %c512_i32 = arith.constant 512 : i32
    %3 = arith.muli %arg1, %c512_i32 : i32
    %4 = tpu.assume_multiple %3, 512 : i32
    %5 = arith.index_cast %4 : i32 to index
    %c0 = arith.constant 0 : index
    %6 = vector.load %arg3[%5, %c0] : memref<512x128xbf16, #tpu.memory_space<vmem>>, vector<512x128xbf16>
    %c0_1 = arith.constant 0 : index
    %c0_2 = arith.constant 0 : index
    %7 = vector.load %arg6[%c0_1, %c0_2] : memref<512x128xf32, #tpu.memory_space<vmem>>, vector<512x128xf32>
    %c0_3 = arith.constant 0 : index
    %c0_4 = arith.constant 0 : index
    %8 = vector.load %arg2[%c0_3, %c0_4] : memref<512x512xi8, #tpu.memory_space<vmem>>, vector<512x512xi8>
    %9 = arith.sitofp %8 : vector<512x512xi8> to vector<512x512xbf16>
    %cst = arith.constant dense<0.000000e+00> : vector<512x128xf32>
    %10 = tpu.matmul %9, %6, %cst {dimension_numbers = #tpu.dot_dimension_numbers<[1], [0], [0], [1], [0, 0, 1, 1], [], []>} : vector<512x512xbf16>, vector<512x128xbf16>, vector<512x128xf32> -> vector<512x128xf32>
    %11 = arith.addf %7, %10 : vector<512x128xf32>
    %c0_5 = arith.constant 0 : index
    %c0_6 = arith.constant 0 : index
    %12 = vector.load %arg6[%c0_5, %c0_6] : memref<512x128xf32, #tpu.memory_space<vmem>>, vector<512x128xf32>
    tpu.vector_store %arg6[%c0_5, %c0_6], %11 {strides = array<i32>} : memref<512x128xf32, #tpu.memory_space<vmem>>, vector<512x128xf32>,
    %c0_i32_7 = arith.constant 0 : i32
    %13 = arith.cmpi eq, %arg1, %c0_i32_7 : i32
    %14 = arith.extui %13 : i1 to i32
    %c0_i32_8 = arith.constant 0 : i32
    %15 = arith.cmpi ne, %14, %c0_i32_8 : i32
    scf.if %15 {
      %c0_9 = arith.constant 0 : index
      %c0_10 = arith.constant 0 : index
      %16 = vector.load %arg6[%c0_9, %c0_10] : memref<512x128xf32, #tpu.memory_space<vmem>>, vector<512x128xf32>
      %c0_11 = arith.constant 0 : index
      %c0_12 = arith.constant 0 : index
      %17 = vector.load %arg4[%c0_11, %c0_12] : memref<1x128xf32, #tpu.memory_space<vmem>>, vector<1x128xf32>
      %18 = vector.broadcast %17 : vector<1x128xf32> to vector<512x128xf32>
      %19 = arith.addf %16, %18 : vector<512x128xf32>
      %c0_13 = arith.constant 0 : index
      %c0_14 = arith.constant 0 : index
      %20 = vector.load %arg5[%c0_13, %c0_14] : memref<512x128xf32, #tpu.memory_space<vmem>>, vector<512x128xf32>
      tpu.vector_store %arg5[%c0_13, %c0_14], %19 {strides = array<i32>} : memref<512x128xf32, #tpu.memory_space<vmem>>, vector<512x128xf32>,
    } else {
    }
    return
  }
  func.func @transform_0(%arg0: i32, %arg1: i32) -> (i32, i32) {
    %c0_i32 = arith.constant 0 : i32
    return %arg0, %arg1 : i32, i32
  }
  func.func @transform_1(%arg0: i32, %arg1: i32) -> (i32, i32) {
    %c0_i32 = arith.constant 0 : i32
    %c0_i32_0 = arith.constant 0 : i32
    %c0_i32_1 = arith.constant 0 : i32
    return %c0_i32, %c0_i32_0 : i32, i32
  }
  func.func @transform_2(%arg0: i32, %arg1: i32) -> (i32, i32) {
    %c0_i32 = arith.constant 0 : i32
    %c0_i32_0 = arith.constant 0 : i32
    %c0_i32_1 = arith.constant 0 : i32
    return %c0_i32, %c0_i32_0 : i32, i32
  }
  func.func @transform_3(%arg0: i32, %arg1: i32) -> (i32, i32) {
    %c0_i32 = arith.constant 0 : i32
    %c0_i32_0 = arith.constant 0 : i32
    return %arg0, %c0_i32 : i32, i32
  }
}

</mosaic_0001>

<llo_original>
// kernel: gcn_node_apply_forward.1
$region0: #{gcn_node_apply_forward.1}
  #allocation0 [shape = 'u32[]', space=smem, size = 0x4, offset = 0x4, fixed_abs, tag = 'smem constant byte address 0x4 - core index']
  #allocation1 [shape = 'u32[144,128]{1,0:T(1,128)}', space=vmem, size = 0x12000, scoped, tag = 'internal scratch']
  #allocation2 [shape = 'f32[512,128]{1,0:T(8,128)}', space=vmem, size = 0x40000, scoped, tag = 'scratch operand']
  %s0 = inlined_call_operand.vmem [shape: s8[512,512], index: 0, kind: input, shape index: {}]
  %s1 = inlined_call_operand.vmem [shape: bf16[512,128], index: 1, kind: input, shape index: {}]
  %s2 = inlined_call_operand.vmem [shape: f32[1,128], index: 2, kind: input, shape index: {}]
  %s3 = inlined_call_operand.vmem [shape: f32[512,128], index: 3, kind: output, shape index: {}]
  %s4 = sld [smem:[#allocation0]]
  $region30: #{gcn_node_apply_forward.1} parent=0
    _
  %s6 = ssub.s32 1, %s4
  %s7 = scalar_select 0, %s6, %s4
  // Predicated region
  $region2: #{gcn_node_apply_forward.1} parent=0 // pred_check
    _
  $region3: #{gcn_node_apply_forward.1} parent=0 // pred_check_branch
    %9 = sbr.rel (0) target = $region5
  $region4: #{gcn_node_apply_forward.1} parent=0 // pred_region
    _
  $region5: #{gcn_node_apply_forward.1} parent=0 // pred_fallthru
    _
  // Predicated region
  $region6: #{gcn_node_apply_forward.1} parent=0 // pred_check
    _
  $region7: #{gcn_node_apply_forward.1} parent=0 // pred_check_branch
    %11 = sbr.rel (0) target = $region9
  $region8: #{gcn_node_apply_forward.1} parent=0 // pred_region
    _
  $region9: #{gcn_node_apply_forward.1} parent=0 // pred_fallthru
    _
  // Predicated region
  $region10: #{gcn_node_apply_forward.1} parent=0 // pred_check
    _
  $region11: #{gcn_node_apply_forward.1} parent=0 // pred_check_branch
    %13 = sbr.rel (0) target = $region13
  $region12: #{gcn_node_apply_forward.1} parent=0 // pred_region
    _
  $region13: #{gcn_node_apply_forward.1} parent=0 // pred_fallthru
    _
  %p15 = scmp.eq.s32.totalorder 0, 0
  // Predicated region
  $region14: #{gcn_node_apply_forward.1} parent=0 // pred_check
    %p16 = pneg %p15
  $region15: #{gcn_node_apply_forward.1} parent=0 // pred_check_branch
    %18 = sbr.rel (%p16) target = $region17
  $region16: #{gcn_node_apply_forward.1} parent=0 // pred_region
    %19 = vst [vmem:[#allocation2] sm:$0xff] 0.0
    %20 = vst [vmem:[#allocation2 + $0x8] sm:$0xff] 0.0
    %21 = vst [vmem:[#allocation2 + $0x10] sm:$0xff] 0.0
    %22 = vst [vmem:[#allocation2 + $0x18] sm:$0xff] 0.0
    %23 = vst [vmem:[#allocation2 + $0x20] sm:$0xff] 0.0
    %24 = vst [vmem:[#allocation2 + $0x28] sm:$0xff] 0.0
    %25 = vst [vmem:[#allocation2 + $0x30] sm:$0xff] 0.0
    %26 = vst [vmem:[#allocation2 + $0x38] sm:$0xff] 0.0
    %27 = vst [vmem:[#allocation2 + $0x40] sm:$0xff] 0.0
    %28 = vst [vmem:[#allocation2 + $0x48] sm:$0xff] 0.0
    %29 = vst [vmem:[#allocation2 + $0x50] sm:$0xff] 0.0
    %30 = vst [vmem:[#allocation2 + $0x58] sm:$0xff] 0.0
    %31 = vst [vmem:[#allocation2 + $0x60] sm:$0xff] 0.0
    %32 = vst [vmem:[#allocation2 + $0x68] sm:$0xff] 0.0
    %33 = vst [vmem:[#allocation2 + $0x70] sm:$0xff] 0.0
    %34 = vst [vmem:[#allocation2 + $0x78] sm:$0xff] 0.0
    %35 = vst [vmem:[#allocation2 + $0x80] sm:$0xff] 0.0
    %36 = vst [vmem:[#allocation2 + $0x88] sm:$0xff] 0.0
    %37 = vst [vmem:[#allocation2 + $0x90] sm:$0xff] 0.0
    %38 = vst [vmem:[#allocation2 + $0x98] sm:$0xff] 0.0
    %39 = vst [vmem:[#allocation2 + $0xa0] sm:$0xff] 0.0
    %40 = vst [vmem:[#allocation2 + $0xa8] sm:$0xff] 0.0
    %41 = vst [vmem:[#allocation2 + $0xb0] sm:$0xff] 0.0
    %42 = vst [vmem:[#allocation2 + $0xb8] sm:$0xff] 0.0
    %43 = vst [vmem:[#allocation2 + $0xc0] sm:$0xff] 0.0
    %44 = vst [vmem:[#allocation2 + $0xc8] sm:$0xff] 0.0
    %45 = vst [vmem:[#allocation2 + $0xd0] sm:$0xff] 0.0
    %46 = vst [vmem:[#allocation2 + $0xd8] sm:$0xff] 0.0
    %47 = vst [vmem:[#allocation2 + $0xe0] sm:$0xff] 0.0
    %48 = vst [vmem:[#allocation2 + $0xe8] sm:$0xff] 0.0
    %49 = vst [vmem:[#allocation2 + $0xf0] sm:$0xff] 0.0
    %50 = vst [vmem:[#allocation2 + $0xf8] sm:$0xff] 0.0
    %51 = vst [vmem:[#allocation2 + $0x100] sm:$0xff] 0.0
    %52 = vst [vmem:[#allocation2 + $0x108] sm:$0xff] 0.0
    %53 = vst [vmem:[#allocation2 + $0x110] sm:$0xff] 0.0
    %54 = vst [vmem:[#allocation2 + $0x118] sm:$0xff] 0.0
    %55 = vst [vmem:[#allocation2 + $0x120] sm:$0xff] 0.0
    %56 = vst [vmem:[#allocation2 + $0x128] sm:$0xff] 0.0
    %57 = vst [vmem:[#allocation2 + $0x130] sm:$0xff] 0.0
    %58 = vst [vmem:[#allocation2 + $0x138] sm:$0xff] 0.0
    %59 = vst [vmem:[#allocation2 + $0x140] sm:$0xff] 0.0
    %60 = vst [vmem:[#allocation2 + $0x148] sm:$0xff] 0.0
    %61 = vst [vmem:[#allocation2 + $0x150] sm:$0xff] 0.0
    %62 = vst [vmem:[#allocation2 + $0x158] sm:$0xff] 0.0
    %63 = vst [vmem:[#allocation2 + $0x160] sm:$0xff] 0.0
    %64 = vst [vmem:[#allocation2 + $0x168] sm:$0xff] 0.0
    %65 = vst [vmem:[#allocation2 + $0x170] sm:$0xff] 0.0
    %66 = vst [vmem:[#allocation2 + $0x178] sm:$0xff] 0.0
    %67 = vst [vmem:[#allocation2 + $0x180] sm:$0xff] 0.0
    %68 = vst [vmem:[#allocation2 + $0x188] sm:$0xff] 0.0
    %69 = vst [vmem:[#allocation2 + $0x190] sm:$0xff] 0.0
    %70 = vst [vmem:[#allocation2 + $0x198] sm:$0xff] 0.0
    %71 = vst [vmem:[#allocation2 + $0x1a0] sm:$0xff] 0.0
    %72 = vst [vmem:[#allocation2 + $0x1a8] sm:$0xff] 0.0
    %73 = vst [vmem:[#allocation2 + $0x1b0] sm:$0xff] 0.0
    %74 = vst [vmem:[#allocation2 + $0x1b8] sm:$0xff] 0.0
    %75 = vst [vmem:[#allocation2 + $0x1c0] sm:$0xff] 0.0
    %76 = vst [vmem:[#allocation2 + $0x1c8] sm:$0xff] 0.0
    %77 = vst [vmem:[#allocation2 + $0x1d0] sm:$0xff] 0.0
    %78 = vst [vmem:[#allocation2 + $0x1d8] sm:$0xff] 0.0
    %79 = vst [vmem:[#allocation2 + $0x1e0] sm:$0xff] 0.0
    %80 = vst [vmem:[#allocation2 + $0x1e8] sm:$0xff] 0.0
    %81 = vst [vmem:[#allocation2 + $0x1f0] sm:$0xff] 0.0
    %82 = vst [vmem:[#allocation2 + $0x1f8] sm:$0xff] 0.0
  $region17: #{gcn_node_apply_forward.1} parent=0 // pred_fallthru
    _
  %s83 = smul.u32 0, 512
  %s84 = sshra.s32 %s83, 3
  %s85 = sand.u32 %s83, 7
  %s86 = smul.addr %s84, 4
  %s87 = scalar_lea.vmem %s1, %s86
  %v88 = vld [vmem:[%s87] sm:$0xf]
  %v89 = vld [vmem:[%s87 + $0x4] sm:$0xf]
  %v90 = vld [vmem:[%s87 + $0x8] sm:$0xf]
  %v91 = vld [vmem:[%s87 + $0xc] sm:$0xf]
  %v92 = vld [vmem:[%s87 + $0x10] sm:$0xf]
  %v93 = vld [vmem:[%s87 + $0x14] sm:$0xf]
  %v94 = vld [vmem:[%s87 + $0x18] sm:$0xf]
  %v95 = vld [vmem:[%s87 + $0x1c] sm:$0xf]
  %v96 = vld [vmem:[%s87 + $0x20] sm:$0xf]
  %v97 = vld [vmem:[%s87 + $0x24] sm:$0xf]
  %v98 = vld [vmem:[%s87 + $0x28] sm:$0xf]
  %v99 = vld [vmem:[%s87 + $0x2c] sm:$0xf]
  %v100 = vld [vmem:[%s87 + $0x30] sm:$0xf]
  %v101 = vld [vmem:[%s87 + $0x34] sm:$0xf]
  %v102 = vld [vmem:[%s87 + $0x38] sm:$0xf]
  %v103 = vld [vmem:[%s87 + $0x3c] sm:$0xf]
  %v104 = vld [vmem:[%s87 + $0x40] sm:$0xf]
  %v105 = vld [vmem:[%s87 + $0x44] sm:$0xf]
  %v106 = vld [vmem:[%s87 + $0x48] sm:$0xf]
  %v107 = vld [vmem:[%s87 + $0x4c] sm:$0xf]
  %v108 = vld [vmem:[%s87 + $0x50] sm:$0xf]
  %v109 = vld [vmem:[%s87 + $0x54] sm:$0xf]
  %v110 = vld [vmem:[%s87 + $0x58] sm:$0xf]
  %v111 = vld [vmem:[%s87 + $0x5c] sm:$0xf]
  %v112 = vld [vmem:[%s87 + $0x60] sm:$0xf]
  %v113 = vld [vmem:[%s87 + $0x64] sm:$0xf]
  %v114 = vld [vmem:[%s87 + $0x68] sm:$0xf]
  %v115 = vld [vmem:[%s87 + $0x6c] sm:$0xf]
  %v116 = vld [vmem:[%s87 + $0x70] sm:$0xf]
  %v117 = vld [vmem:[%s87 + $0x74] sm:$0xf]
  %v118 = vld [vmem:[%s87 + $0x78] sm:$0xf]
  %v119 = vld [vmem:[%s87 + $0x7c] sm:$0xf]
  %v120 = vld [vmem:[%s87 + $0x80] sm:$0xf]
  %v121 = vld [vmem:[%s87 + $0x84] sm:$0xf]
  %v122 = vld [vmem:[%s87 + $0x88] sm:$0xf]
  %v123 = vld [vmem:[%s87 + $0x8c] sm:$0xf]
  %v124 = vld [vmem:[%s87 + $0x90] sm:$0xf]
  %v125 = vld [vmem:[%s87 + $0x94] sm:$0xf]
  %v126 = vld [vmem:[%s87 + $0x98] sm:$0xf]
  %v127 = vld [vmem:[%s87 + $0x9c] sm:$0xf]
  %v128 = vld [vmem:[%s87 + $0xa0] sm:$0xf]
  %v129 = vld [vmem:[%s87 + $0xa4] sm:$0xf]
  %v130 = vld [vmem:[%s87 + $0xa8] sm:$0xf]
  %v131 = vld [vmem:[%s87 + $0xac] sm:$0xf]
  %v132 = vld [vmem:[%s87 + $0xb0] sm:$0xf]
  %v133 = vld [vmem:[%s87 + $0xb4] sm:$0xf]
  %v134 = vld [vmem:[%s87 + $0xb8] sm:$0xf]
  %v135 = vld [vmem:[%s87 + $0xbc] sm:$0xf]
  %v136 = vld [vmem:[%s87 + $0xc0] sm:$0xf]
  %v137 = vld [vmem:[%s87 + $0xc4] sm:$0xf]
  %v138 = vld [vmem:[%s87 + $0xc8] sm:$0xf]
  %v139 = vld [vmem:[%s87 + $0xcc] sm:$0xf]
  %v140 = vld [vmem:[%s87 + $0xd0] sm:$0xf]
  %v141 = vld [vmem:[%s87 + $0xd4] sm:$0xf]
  %v142 = vld [vmem:[%s87 + $0xd8] sm:$0xf]
  %v143 = vld [vmem:[%s87 + $0xdc] sm:$0xf]
  %v144 = vld [vmem:[%s87 + $0xe0] sm:$0xf]
  %v145 = vld [vmem:[%s87 + $0xe4] sm:$0xf]
  %v146 = vld [vmem:[%s87 + $0xe8] sm:$0xf]
  %v147 = vld [vmem:[%s87 + $0xec] sm:$0xf]
  %v148 = vld [vmem:[%s87 + $0xf0] sm:$0xf]
  %v149 = vld [vmem:[%s87 + $0xf4] sm:$0xf]
  %v150 = vld [vmem:[%s87 + $0xf8] sm:$0xf]
  %v151 = vld [vmem:[%s87 + $0xfc] sm:$0xf]
  %v152 = vld [vmem:[#allocation2] sm:$0xff]
  %v153 = vld [vmem:[#allocation2 + $0x8] sm:$0xff]
  %v154 = vld [vmem:[#allocation2 + $0x10] sm:$0xff]
  %v155 = vld [vmem:[#allocation2 + $0x18] sm:$0xff]
  %v156 = vld [vmem:[#allocation2 + $0x20] sm:$0xff]
  %v157 = vld [vmem:[#allocation2 + $0x28] sm:$0xff]
  %v158 = vld [vmem:[#allocation2 + $0x30] sm:$0xff]
  %v159 = vld [vmem:[#allocation2 + $0x38] sm:$0xff]
  %v160 = vld [vmem:[#allocation2 + $0x40] sm:$0xff]
  %v161 = vld [vmem:[#allocation2 + $0x48] sm:$0xff]
  %v162 = vld [vmem:[#allocation2 + $0x50] sm:$0xff]
  %v163 = vld [vmem:[#allocation2 + $0x58] sm:$0xff]
  %v164 = vld [vmem:[#allocation2 + $0x60] sm:$0xff]
  %v165 = vld [vmem:[#allocation2 + $0x68] sm:$0xff]
  %v166 = vld [vmem:[#allocation2 + $0x70] sm:$0xff]
  %v167 = vld [vmem:[#allocation2 + $0x78] sm:$0xff]
  %v168 = vld [vmem:[#allocation2 + $0x80] sm:$0xff]
  %v169 = vld [vmem:[#allocation2 + $0x88] sm:$0xff]
  %v170 = vld [vmem:[#allocation2 + $0x90] sm:$0xff]
  %v171 = vld [vmem:[#allocation2 + $0x98] sm:$0xff]
  %v172 = vld [vmem:[#allocation2 + $0xa0] sm:$0xff]
  %v173 = vld [vmem:[#allocation2 + $0xa8] sm:$0xff]
  %v174 = vld [vmem:[#allocation2 + $0xb0] sm:$0xff]
  %v175 = vld [vmem:[#allocation2 + $0xb8] sm:$0xff]
  %v176 = vld [vmem:[#allocation2 + $0xc0] sm:$0xff]
  %v177 = vld [vmem:[#allocation2 + $0xc8] sm:$0xff]
  %v178 = vld [vmem:[#allocation2 + $0xd0] sm:$0xff]
  %v179 = vld [vmem:[#allocation2 + $0xd8] sm:$0xff]
  %v180 = vld [vmem:[#allocation2 + $0xe0] sm:$0xff]
  %v181 = vld [vmem:[#allocation2 + $0xe8] sm:$0xff]
  %v182 = vld [vmem:[#allocation2 + $0xf0] sm:$0xff]
  %v183 = vld [vmem:[#allocation2 + $0xf8] sm:$0xff]
  %v184 = vld [vmem:[#allocation2 + $0x100] sm:$0xff]
  %v185 = vld [vmem:[#allocation2 + $0x108] sm:$0xff]
  %v186 = vld [vmem:[#allocation2 + $0x110] sm:$0xff]
  %v187 = vld [vmem:[#allocation2 + $0x118] sm:$0xff]
  %v188 = vld [vmem:[#allocation2 + $0x120] sm:$0xff]
  %v189 = vld [vmem:[#allocation2 + $0x128] sm:$0xff]
  %v190 = vld [vmem:[#allocation2 + $0x130] sm:$0xff]
  %v191 = vld [vmem:[#allocation2 + $0x138] sm:$0xff]
  %v192 = vld [vmem:[#allocation2 + $0x140] sm:$0xff]
  %v193 = vld [vmem:[#allocation2 + $0x148] sm:$0xff]
  %v194 = vld [vmem:[#allocation2 + $0x150] sm:$0xff]
  %v195 = vld [vmem:[#allocation2 + $0x158] sm:$0xff]
  %v196 = vld [vmem:[#allocation2 + $0x160] sm:$0xff]
  %v197 = vld [vmem:[#allocation2 + $0x168] sm:$0xff]
  %v198 = vld [vmem:[#allocation2 + $0x170] sm:$0xff]
  %v199 = vld [vmem:[#allocation2 + $0x178] sm:$0xff]
  %v200 = vld [vmem:[#allocation2 + $0x180] sm:$0xff]
  %v201 = vld [vmem:[#allocation2 + $0x188] sm:$0xff]
  %v202 = vld [vmem:[#allocation2 + $0x190] sm:$0xff]
  %v203 = vld [vmem:[#allocation2 + $0x198] sm:$0xff]
  %v204 = vld [vmem:[#allocation2 + $0x1a0] sm:$0xff]
  %v205 = vld [vmem:[#allocation2 + $0x1a8] sm:$0xff]
  %v206 = vld [vmem:[#allocation2 + $0x1b0] sm:$0xff]
  %v207 = vld [vmem:[#allocation2 + $0x1b8] sm:$0xff]
  %v208 = vld [vmem:[#allocation2 + $0x1c0] sm:$0xff]
  %v209 = vld [vmem:[#allocation2 + $0x1c8] sm:$0xff]
  %v210 = vld [vmem:[#allocation2 + $0x1d0] sm:$0xff]
  %v211 = vld [vmem:[#allocation2 + $0x1d8] sm:$0xff]
  %v212 = vld [vmem:[#allocation2 + $0x1e0] sm:$0xff]
  %v213 = vld [vmem:[#allocation2 + $0x1e8] sm:$0xff]
  %v214 = vld [vmem:[#allocation2 + $0x1f0] sm:$0xff]
  %v215 = vld [vmem:[#allocation2 + $0x1f8] sm:$0xff]
  %v216 = vld [vmem:[%s0] sm:$0xff]
  %v217 = vld [vmem:[%s0 + $0x8] sm:$0xff]
  %v218 = vld [vmem:[%s0 + $0x10] sm:$0xff]
  %v219 = vld [vmem:[%s0 + $0x18] sm:$0xff]
  %v220 = vld [vmem:[%s0 + $0x20] sm:$0xff]
  %v221 = vld [vmem:[%s0 + $0x28] sm:$0xff]
  %v222 = vld [vmem:[%s0 + $0x30] sm:$0xff]
  %v223 = vld [vmem:[%s0 + $0x38] sm:$0xff]
  %v224 = vld [vmem:[%s0 + $0x40] sm:$0xff]
  %v225 = vld [vmem:[%s0 + $0x48] sm:$0xff]
  %v226 = vld [vmem:[%s0 + $0x50] sm:$0xff]
  %v227 = vld [vmem:[%s0 + $0x58] sm:$0xff]
  %v228 = vld [vmem:[%s0 + $0x60] sm:$0xff]
  %v229 = vld [vmem:[%s0 + $0x68] sm:$0xff]
  %v230 = vld [vmem:[%s0 + $0x70] sm:$0xff]
  %v231 = vld [vmem:[%s0 + $0x78] sm:$0xff]
  %v232 = vld [vmem:[%s0 + $0x80] sm:$0xff]
  %v233 = vld [vmem:[%s0 + $0x88] sm:$0xff]
  %v234 = vld [vmem:[%s0 + $0x90] sm:$0xff]
  %v235 = vld [vmem:[%s0 + $0x98] sm:$0xff]
  %v236 = vld [vmem:[%s0 + $0xa0] sm:$0xff]
  %v237 = vld [vmem:[%s0 + $0xa8] sm:$0xff]
  %v238 = vld [vmem:[%s0 + $0xb0] sm:$0xff]
  %v239 = vld [vmem:[%s0 + $0xb8] sm:$0xff]
  %v240 = vld [vmem:[%s0 + $0xc0] sm:$0xff]
  %v241 = vld [vmem:[%s0 + $0xc8] sm:$0xff]
  %v242 = vld [vmem:[%s0 + $0xd0] sm:$0xff]
  %v243 = vld [vmem:[%s0 + $0xd8] sm:$0xff]
  %v244 = vld [vmem:[%s0 + $0xe0] sm:$0xff]
  %v245 = vld [vmem:[%s0 + $0xe8] sm:$0xff]
  %v246 = vld [vmem:[%s0 + $0xf0] sm:$0xff]
  %v247 = vld [vmem:[%s0 + $0xf8] sm:$0xff]
  %v248 = vld [vmem:[%s0 + $0x100] sm:$0xff]
  %v249 = vld [vmem:[%s0 + $0x108] sm:$0xff]
  %v250 = vld [vmem:[%s0 + $0x110] sm:$0xff]
  %v251 = vld [vmem:[%s0 + $0x118] sm:$0xff]
  %v252 = vld [vmem:[%s0 + $0x120] sm:$0xff]
  %v253 = vld [vmem:[%s0 + $0x128] sm:$0xff]
  %v254 = vld [vmem:[%s0 + $0x130] sm:$0xff]
  %v255 = vld [vmem:[%s0 + $0x138] sm:$0xff]
  %v256 = vld [vmem:[%s0 + $0x140] sm:$0xff]
  %v257 = vld [vmem:[%s0 + $0x148] sm:$0xff]
  %v258 = vld [vmem:[%s0 + $0x150] sm:$0xff]
  %v259 = vld [vmem:[%s0 + $0x158] sm:$0xff]
  %v260 = vld [vmem:[%s0 + $0x160] sm:$0xff]
  %v261 = vld [vmem:[%s0 + $0x168] sm:$0xff]
  %v262 = vld [vmem:[%s0 + $0x170] sm:$0xff]
  %v263 = vld [vmem:[%s0 + $0x178] sm:$0xff]
  %v264 = vld [vmem:[%s0 + $0x180] sm:$0xff]
  %v265 = vld [vmem:[%s0 + $0x188] sm:$0xff]
  %v266 = vld [vmem:[%s0 + $0x190] sm:$0xff]
  %v267 = vld [vmem:[%s0 + $0x198] sm:$0xff]
  %v268 = vld [vmem:[%s0 + $0x1a0] sm:$0xff]
  %v269 = vld [vmem:[%s0 + $0x1a8] sm:$0xff]
  %v270 = vld [vmem:[%s0 + $0x1b0] sm:$0xff]
  %v271 = vld [vmem:[%s0 + $0x1b8] sm:$0xff]
  %v272 = vld [vmem:[%s0 + $0x1c0] sm:$0xff]
  %v273 = vld [vmem:[%s0 + $0x1c8] sm:$0xff]
  %v274 = vld [vmem:[%s0 + $0x1d0] sm:$0xff]
  %v275 = vld [vmem:[%s0 + $0x1d8] sm:$0xff]
  %v276 = vld [vmem:[%s0 + $0x1e0] sm:$0xff]
  %v277 = vld [vmem:[%s0 + $0x1e8] sm:$0xff]
  %v278 = vld [vmem:[%s0 + $0x1f0] sm:$0xff]
  %v279 = vld [vmem:[%s0 + $0x1f8] sm:$0xff]
  %v280 = vunpack.c.l.s8.bf16 %v216
  %v281 = vunpack.c.l.s8.bf16 %v217
  %v282 = vunpack.c.l.s8.bf16 %v218
  %v283 = vunpack.c.l.s8.bf16 %v219
  %v284 = vunpack.c.h.s8.bf16 %v216
  %v285 = vunpack.c.h.s8.bf16 %v217
  %v286 = vunpack.c.h.s8.bf16 %v218
  %v287 = vunpack.c.h.s8.bf16 %v219
  %v288 = vunpack.c.l.s8.bf16 %v220
  %v289 = vunpack.c.l.s8.bf16 %v221
  %v290 = vunpack.c.l.s8.bf16 %v222
  %v291 = vunpack.c.l.s8.bf16 %v223
  %v292 = vunpack.c.h.s8.bf16 %v220
  %v293 = vunpack.c.h.s8.bf16 %v221
  %v294 = vunpack.c.h.s8.bf16 %v222
  %v295 = vunpack.c.h.s8.bf16 %v223
  %v296 = vunpack.c.l.s8.bf16 %v224
  %v297 = vunpack.c.l.s8.bf16 %v225
  %v298 = vunpack.c.l.s8.bf16 %v226
  %v299 = vunpack.c.l.s8.bf16 %v227
  %v300 = vunpack.c.h.s8.bf16 %v224
  %v301 = vunpack.c.h.s8.bf16 %v225
  %v302 = vunpack.c.h.s8.bf16 %v226
  %v303 = vunpack.c.h.s8.bf16 %v227
  %v304 = vunpack.c.l.s8.bf16 %v228
  %v305 = vunpack.c.l.s8.bf16 %v229
  %v306 = vunpack.c.l.s8.bf16 %v230
  %v307 = vunpack.c.l.s8.bf16 %v231
  %v308 = vunpack.c.h.s8.bf16 %v228
  %v309 = vunpack.c.h.s8.bf16 %v229
  %v310 = vunpack.c.h.s8.bf16 %v230
  %v311 = vunpack.c.h.s8.bf16 %v231
  %v312 = vunpack.c.l.s8.bf16 %v232
  %v313 = vunpack.c.l.s8.bf16 %v233
  %v314 = vunpack.c.l.s8.bf16 %v234
  %v315 = vunpack.c.l.s8.bf16 %v235
  %v316 = vunpack.c.h.s8.bf16 %v232
  %v317 = vunpack.c.h.s8.bf16 %v233
  %v318 = vunpack.c.h.s8.bf16 %v234
  %v319 = vunpack.c.h.s8.bf16 %v235
  %v320 = vunpack.c.l.s8.bf16 %v236
  %v321 = vunpack.c.l.s8.bf16 %v237
  %v322 = vunpack.c.l.s8.bf16 %v238
  %v323 = vunpack.c.l.s8.bf16 %v239
  %v324 = vunpack.c.h.s8.bf16 %v236
  %v325 = vunpack.c.h.s8.bf16 %v237
  %v326 = vunpack.c.h.s8.bf16 %v238
  %v327 = vunpack.c.h.s8.bf16 %v239
  %v328 = vunpack.c.l.s8.bf16 %v240
  %v329 = vunpack.c.l.s8.bf16 %v241
  %v330 = vunpack.c.l.s8.bf16 %v242
  %v331 = vunpack.c.l.s8.bf16 %v243
  %v332 = vunpack.c.h.s8.bf16 %v240
  %v333 = vunpack.c.h.s8.bf16 %v241
  %v334 = vunpack.c.h.s8.bf16 %v242
  %v335 = vunpack.c.h.s8.bf16 %v243
  %v336 = vunpack.c.l.s8.bf16 %v244
  %v337 = vunpack.c.l.s8.bf16 %v245
  %v338 = vunpack.c.l.s8.bf16 %v246
  %v339 = vunpack.c.l.s8.bf16 %v247
  %v340 = vunpack.c.h.s8.bf16 %v244
  %v341 = vunpack.c.h.s8.bf16 %v245
  %v342 = vunpack.c.h.s8.bf16 %v246
  %v343 = vunpack.c.h.s8.bf16 %v247
  %v344 = vunpack.c.l.s8.bf16 %v248
  %v345 = vunpack.c.l.s8.bf16 %v249
  %v346 = vunpack.c.l.s8.bf16 %v250
  %v347 = vunpack.c.l.s8.bf16 %v251
  %v348 = vunpack.c.h.s8.bf16 %v248
  %v349 = vunpack.c.h.s8.bf16 %v249
  %v350 = vunpack.c.h.s8.bf16 %v250
  %v351 = vunpack.c.h.s8.bf16 %v251
  %v352 = vunpack.c.l.s8.bf16 %v252
  %v353 = vunpack.c.l.s8.bf16 %v253
  %v354 = vunpack.c.l.s8.bf16 %v254
  %v355 = vunpack.c.l.s8.bf16 %v255
  %v356 = vunpack.c.h.s8.bf16 %v252
  %v357 = vunpack.c.h.s8.bf16 %v253
  %v358 = vunpack.c.h.s8.bf16 %v254
  %v359 = vunpack.c.h.s8.bf16 %v255
  %v360 = vunpack.c.l.s8.bf16 %v256
  %v361 = vunpack.c.l.s8.bf16 %v257
  %v362 = vunpack.c.l.s8.bf16 %v258
  %v363 = vunpack.c.l.s8.bf16 %v259
  %v364 = vunpack.c.h.s8.bf16 %v256
  %v365 = vunpack.c.h.s8.bf16 %v257
  %v366 = vunpack.c.h.s8.bf16 %v258
  %v367 = vunpack.c.h.s8.bf16 %v259
  %v368 = vunpack.c.l.s8.bf16 %v260
  %v369 = vunpack.c.l.s8.bf16 %v261
  %v370 = vunpack.c.l.s8.bf16 %v262
  %v371 = vunpack.c.l.s8.bf16 %v263
  %v372 = vunpack.c.h.s8.bf16 %v260
  %v373 = vunpack.c.h.s8.bf16 %v261
  %v374 = vunpack.c.h.s8.bf16 %v262
  %v375 = vunpack.c.h.s8.bf16 %v263
  %v376 = vunpack.c.l.s8.bf16 %v264
  %v377 = vunpack.c.l.s8.bf16 %v265
  %v378 = vunpack.c.l.s8.bf16 %v266
  %v379 = vunpack.c.l.s8.bf16 %v267
  %v380 = vunpack.c.h.s8.bf16 %v264
  %v381 = vunpack.c.h.s8.bf16 %v265
  %v382 = vunpack.c.h.s8.bf16 %v266
  %v383 = vunpack.c.h.s8.bf16 %v267
  %v384 = vunpack.c.l.s8.bf16 %v268
  %v385 = vunpack.c.l.s8.bf16 %v269
  %v386 = vunpack.c.l.s8.bf16 %v270
  %v387 = vunpack.c.l.s8.bf16 %v271
  %v388 = vunpack.c.h.s8.bf16 %v268
  %v389 = vunpack.c.h.s8.bf16 %v269
  %v390 = vunpack.c.h.s8.bf16 %v270
  %v391 = vunpack.c.h.s8.bf16 %v271
  %v392 = vunpack.c.l.s8.bf16 %v272
  %v393 = vunpack.c.l.s8.bf16 %v273
  %v394 = vunpack.c.l.s8.bf16 %v274
  %v395 = vunpack.c.l.s8.bf16 %v275
  %v396 = vunpack.c.h.s8.bf16 %v272
  %v397 = vunpack.c.h.s8.bf16 %v273
  %v398 = vunpack.c.h.s8.bf16 %v274
  %v399 = vunpack.c.h.s8.bf16 %v275
  %v400 = vunpack.c.l.s8.bf16 %v276
  %v401 = vunpack.c.l.s8.bf16 %v277
  %v402 = vunpack.c.l.s8.bf16 %v278
  %v403 = vunpack.c.l.s8.bf16 %v279
  %v404 = vunpack.c.h.s8.bf16 %v276
  %v405 = vunpack.c.h.s8.bf16 %v277
  %v406 = vunpack.c.h.s8.bf16 %v278
  %v407 = vunpack.c.h.s8.bf16 %v279
  %v472 = vunpack.c.l.b16 %v88
  %v473 = vunpack.c.l.b16 %v89
  %v474 = vunpack.c.l.b16 %v90
  %v475 = vunpack.c.l.b16 %v91
  %v476 = vunpack.c.l.b16 %v92
  %v477 = vunpack.c.l.b16 %v93
  %v478 = vunpack.c.l.b16 %v94
  %v479 = vunpack.c.l.b16 %v95
  %v480 = vunpack.c.l.b16 %v96
  %v481 = vunpack.c.l.b16 %v97
  %v482 = vunpack.c.l.b16 %v98
  %v483 = vunpack.c.l.b16 %v99
  %v484 = vunpack.c.l.b16 %v100
  %v485 = vunpack.c.l.b16 %v101
  %v486 = vunpack.c.l.b16 %v102
  %v487 = vunpack.c.l.b16 %v103
  %v488 = vunpack.c.l.b16 %v104
  %v489 = vunpack.c.l.b16 %v105
  %v490 = vunpack.c.l.b16 %v106
  %v491 = vunpack.c.l.b16 %v107
  %v492 = vunpack.c.l.b16 %v108
  %v493 = vunpack.c.l.b16 %v109
  %v494 = vunpack.c.l.b16 %v110
  %v495 = vunpack.c.l.b16 %v111
  %v496 = vunpack.c.l.b16 %v112
  %v497 = vunpack.c.l.b16 %v113
  %v498 = vunpack.c.l.b16 %v114
  %v499 = vunpack.c.l.b16 %v115
  %v500 = vunpack.c.l.b16 %v116
  %v501 = vunpack.c.l.b16 %v117
  %v502 = vunpack.c.l.b16 %v118
  %v503 = vunpack.c.l.b16 %v119
  %v504 = vunpack.c.l.b16 %v120
  %v505 = vunpack.c.l.b16 %v121
  %v506 = vunpack.c.l.b16 %v122
  %v507 = vunpack.c.l.b16 %v123
  %v508 = vunpack.c.l.b16 %v124
  %v509 = vunpack.c.l.b16 %v125
  %v510 = vunpack.c.l.b16 %v126
  %v511 = vunpack.c.l.b16 %v127
  %v512 = vunpack.c.l.b16 %v128
  %v513 = vunpack.c.l.b16 %v129
  %v514 = vunpack.c.l.b16 %v130
  %v515 = vunpack.c.l.b16 %v131
  %v516 = vunpack.c.l.b16 %v132
  %v517 = vunpack.c.l.b16 %v133
  %v518 = vunpack.c.l.b16 %v134
  %v519 = vunpack.c.l.b16 %v135
  %v520 = vunpack.c.l.b16 %v136
  %v521 = vunpack.c.l.b16 %v137
  %v522 = vunpack.c.l.b16 %v138
  %v523 = vunpack.c.l.b16 %v139
  %v524 = vunpack.c.l.b16 %v140
  %v525 = vunpack.c.l.b16 %v141
  %v526 = vunpack.c.l.b16 %v142
  %v527 = vunpack.c.l.b16 %v143
  %v528 = vunpack.c.l.b16 %v144
  %v529 = vunpack.c.l.b16 %v145
  %v530 = vunpack.c.l.b16 %v146
  %v531 = vunpack.c.l.b16 %v147
  %v532 = vunpack.c.l.b16 %v148
  %v533 = vunpack.c.l.b16 %v149
  %v534 = vunpack.c.l.b16 %v150
  %v535 = vunpack.c.l.b16 %v151
  %v536 = vpack.c.b16 %v473, %v472
  %v537 = vpack.c.b16 %v475, %v474
  %v538 = vpack.c.b16 %v477, %v476
  %v539 = vpack.c.b16 %v479, %v478
  %v540 = vpack.c.b16 %v481, %v480
  %v541 = vpack.c.b16 %v483, %v482
  %v542 = vpack.c.b16 %v485, %v484
  %v543 = vpack.c.b16 %v487, %v486
  %v544 = vpack.c.b16 %v489, %v488
  %v545 = vpack.c.b16 %v491, %v490
  %v546 = vpack.c.b16 %v493, %v492
  %v547 = vpack.c.b16 %v495, %v494
  %v548 = vpack.c.b16 %v497, %v496
  %v549 = vpack.c.b16 %v499, %v498
  %v550 = vpack.c.b16 %v501, %v500
  %v551 = vpack.c.b16 %v503, %v502
  %v552 = vpack.c.b16 %v505, %v504
  %v553 = vpack.c.b16 %v507, %v506
  %v554 = vpack.c.b16 %v509, %v508
  %v555 = vpack.c.b16 %v511, %v510
  %v556 = vpack.c.b16 %v513, %v512
  %v557 = vpack.c.b16 %v515, %v514
  %v558 = vpack.c.b16 %v517, %v516
  %v559 = vpack.c.b16 %v519, %v518
  %v560 = vpack.c.b16 %v521, %v520
  %v561 = vpack.c.b16 %v523, %v522
  %v562 = vpack.c.b16 %v525, %v524
  %v563 = vpack.c.b16 %v527, %v526
  %v564 = vpack.c.b16 %v529, %v528
  %v565 = vpack.c.b16 %v531, %v530
  %v566 = vpack.c.b16 %v533, %v532
  %v567 = vpack.c.b16 %v535, %v534
  %600 = vmatprep.subr.bf16.mxu0 0
  %601 = vmatpush1.bf16.msra.mxu0 %v536
  %602 = vmatprep.subr.bf16.mxu0 0
  %603 = vmatpush1.bf16.msra.mxu0 %v537
  %604 = vmatprep.subr.bf16.mxu0 0
  %605 = vmatpush1.bf16.msra.mxu0 %v538
  %606 = vmatprep.subr.bf16.mxu0 0
  %607 = vmatpush1.bf16.msra.mxu0 %v539
  %608 = vmatprep.subr.bf16.mxu0 0
  %609 = vmatpush1.bf16.msra.mxu0 %v540
  %610 = vmatprep.subr.bf16.mxu0 0
  %611 = vmatpush1.bf16.msra.mxu0 %v541
  %612 = vmatprep.subr.bf16.mxu0 0
  %613 = vmatpush1.bf16.msra.mxu0 %v542
  %614 = vmatprep.subr.bf16.mxu0 0
  %615 = vmatpush1.bf16.msra.mxu0 %v543
  %616 = vmatprep.subr.bf16.mxu0 0
  %617 = vmatpush1.bf16.msra.mxu0 %v544
  %618 = vmatprep.subr.bf16.mxu0 0
  %619 = vmatpush1.bf16.msra.mxu0 %v545
  %620 = vmatprep.subr.bf16.mxu0 0
  %621 = vmatpush1.bf16.msra.mxu0 %v546
  %622 = vmatprep.subr.bf16.mxu0 0
  %623 = vmatpush1.bf16.msra.mxu0 %v547
  %624 = vmatprep.subr.bf16.mxu0 0
  %625 = vmatpush1.bf16.msra.mxu0 %v548
  %626 = vmatprep.subr.bf16.mxu0 0
  %627 = vmatpush1.bf16.msra.mxu0 %v549
  %628 = vmatprep.subr.bf16.mxu0 0
  %629 = vmatpush1.bf16.msra.mxu0 %v550
  %630 = vmatprep.subr.bf16.mxu0 0
  %631 = vmatpush1.bf16.msra.mxu0 %v551
  %632 = vmatprep.mubr.bf16.mxu0 %v281
  %633 = vmatmul.mubr.bf16.gmra.mrb[0].mxu0 %v280
  %v634 = vpop.f32.mrb[0].mxu0
  %v635 = vadd.f32 0.0, %v634
  %v636 = vpop.f32.mrb[0].mxu0
  %v637 = vpop.f32.mrb[0].mxu0
  %v638 = vadd.f32 0.0, %v637
  %v639 = vpop.f32.mrb[0].mxu0
  %640 = vmatprep.mubr.bf16.mxu0 %v285
  %641 = vmatmul.mubr.bf16.gmra.mrb[0].mxu0 %v284
  %v642 = vpop.f32.mrb[0].mxu0
  %v643 = vadd.f32 0.0, %v642
  %v644 = vpop.f32.mrb[0].mxu0
  %v645 = vpop.f32.mrb[0].mxu0
  %v646 = vadd.f32 0.0, %v645
  %v647 = vpop.f32.mrb[0].mxu0
  %648 = vmatprep.mubr.bf16.mxu0 %v289
  %649 = vmatmul.mubr.bf16.gmra.mrb[0].mxu0 %v288
  %v650 = vpop.f32.mrb[0].mxu0
  %v651 = vadd.f32 0.0, %v650
  %v652 = vpop.f32.mrb[0].mxu0
  %v653 = vpop.f32.mrb[0].mxu0
  %v654 = vadd.f32 0.0, %v653
  %v655 = vpop.f32.mrb[0].mxu0
  %656 = vmatprep.mubr.bf16.mxu0 %v293
  %657 = vmatmul.mubr.bf16.gmra.mrb[0].mxu0 %v292
  %v658 = vpop.f32.mrb[0].mxu0
  %v659 = vadd.f32 0.0, %v658
  %v660 = vpop.f32.mrb[0].mxu0
  %v661 = vpop.f32.mrb[0].mxu0
  %v662 = vadd.f32 0.0, %v661
  %v663 = vpop.f32.mrb[0].mxu0
  %664 = vmatprep.mubr.bf16.mxu0 %v297
  %665 = vmatmul.mubr.bf16.gmra.mrb[0].mxu0 %v296
  %v666 = vpop.f32.mrb[0].mxu0
  %v667 = vadd.f32 0.0, %v666
  %v668 = vpop.f32.mrb[0].mxu0
  %v669 = vpop.f32.mrb[0].mxu0
  %v670 = vadd.f32 0.0, %v669
  %v671 = vpop.f32.mrb[0].mxu0
  %672 = vmatprep.mubr.bf16.mxu0 %v301
  %673 = vmatmul.mubr.bf16.gmra.mrb[0].mxu0 %v300
  %v674 = vpop.f32.mrb[0].mxu0
  %v675 = vadd.f32 0.0, %v674
  %v676 = vpop.f32.mrb[0].mxu0
  %v677 = vpop.f32.mrb[0].mxu0
  %v678 = vadd.f32 0.0, %v677
  %v679 = vpop.f32.mrb[0].mxu0
  %680 = vmatprep.mubr.bf16.mxu0 %v305
  %681 = vmatmul.mubr.bf16.gmra.mrb[0].mxu0 %v304
  %v682 = vpop.f32.mrb[0].mxu0
  %v683 = vadd.f32 0.0, %v682
  %v684 = vpop.f32.mrb[0].mxu0
  %v685 = vpop.f32.mrb[0].mxu0
  %v686 = vadd.f32 0.0, %v685
  %v687 = vpop.f32.mrb[0].mxu0
  %688 = vmatprep.mubr.bf16.mxu0 %v309
  %689 = vmatmul.mubr.bf16.gmra.mrb[0].mxu0 %v308
  %v690 = vpop.f32.mrb[0].mxu0
  %v691 = vadd.f32 0.0, %v690
  %v692 = vpop.f32.mrb[0].mxu0
  %v693 = vpop.f32.mrb[0].mxu0
  %v694 = vadd.f32 0.0, %v693
  %v695 = vpop.f32.mrb[0].mxu0
  %696 = vmatprep.mubr.bf16.mxu0 %v313
  %697 = vmatmul.mubr.bf16.gmra.mrb[0].mxu0 %v312
  %v698 = vpop.f32.mrb[0].mxu0
  %v699 = vadd.f32 0.0, %v698
  %v700 = vpop.f32.mrb[0].mxu0
  %v701 = vpop.f32.mrb[0].mxu0
  %v702 = vadd.f32 0.0, %v701
  %v703 = vpop.f32.mrb[0].mxu0
  %704 = vmatprep.mubr.bf16.mxu0 %v317
  %705 = vmatmul.mubr.bf16.gmra.mrb[0].mxu0 %v316
  %v706 = vpop.f32.mrb[0].mxu0
  %v707 = vadd.f32 0.0, %v706
  %v708 = vpop.f32.mrb[0].mxu0
  %v709 = vpop.f32.mrb[0].mxu0
  %v710 = vadd.f32 0.0, %v709
  %v711 = vpop.f32.mrb[0].mxu0
  %712 = vmatprep.mubr.bf16.mxu0 %v321
  %713 = vmatmul.mubr.bf16.gmra.mrb[0].mxu0 %v320
  %v714 = vpop.f32.mrb[0].mxu0
  %v715 = vadd.f32 0.0, %v714
  %v716 = vpop.f32.mrb[0].mxu0
  %v717 = vpop.f32.mrb[0].mxu0
  %v718 = vadd.f32 0.0, %v717
  %v719 = vpop.f32.mrb[0].mxu0
  %720 = vmatprep.mubr.bf16.mxu0 %v325
  %721 = vmatmul.mubr.bf16.gmra.mrb[0].mxu0 %v324
  %v722 = vpop.f32.mrb[0].mxu0
  %v723 = vadd.f32 0.0, %v722
  %v724 = vpop.f32.mrb[0].mxu0
  %v725 = vpop.f32.mrb[0].mxu0
  %v726 = vadd.f32 0.0, %v725
  %v727 = vpop.f32.mrb[0].mxu0
  %728 = vmatprep.mubr.bf16.mxu0 %v329
  %729 = vmatmul.mubr.bf16.gmra.mrb[0].mxu0 %v328
  %v730 = vpop.f32.mrb[0].mxu0
  %v731 = vadd.f32 0.0, %v730
  %v732 = vpop.f32.mrb[0].mxu0
  %v733 = vpop.f32.mrb[0].mxu0
  %v734 = vadd.f32 0.0, %v733
  %v735 = vpop.f32.mrb[0].mxu0
  %736 = vmatprep.mubr.bf16.mxu0 %v333
  %737 = vmatmul.mubr.bf16.gmra.mrb[0].mxu0 %v332
  %v738 = vpop.f32.mrb[0].mxu0
  %v739 = vadd.f32 0.0, %v738
  %v740 = vpop.f32.mrb[0].mxu0
  %v741 = vpop.f32.mrb[0].mxu0
  %v742 = vadd.f32 0.0, %v741
  %v743 = vpop.f32.mrb[0].mxu0
  %744 = vmatprep.mubr.bf16.mxu0 %v337
  %745 = vmatmul.mubr.bf16.gmra.mrb[0].mxu0 %v336
  %v746 = vpop.f32.mrb[0].mxu0
  %v747 = vadd.f32 0.0, %v746
  %v748 = vpop.f32.mrb[0].mxu0
  %v749 = vpop.f32.mrb[0].mxu0
  %v750 = vadd.f32 0.0, %v749
  %v751 = vpop.f32.mrb[0].mxu0
  %752 = vmatprep.mubr.bf16.mxu0 %v341
  %753 = vmatmul.mubr.bf16.gmra.mrb[0].mxu0 %v340
  %v754 = vpop.f32.mrb[0].mxu0
  %v755 = vadd.f32 0.0, %v754
  %v756 = vpop.f32.mrb[0].mxu0
  %v757 = vpop.f32.mrb[0].mxu0
  %v758 = vadd.f32 0.0, %v757
  %v759 = vpop.f32.mrb[0].mxu0
  %760 = vmatprep.mubr.bf16.mxu0 %v345
  %761 = vmatmul.mubr.bf16.gmra.mrb[0].mxu0 %v344
  %v762 = vpop.f32.mrb[0].mxu0
  %v763 = vadd.f32 0.0, %v762
  %v764 = vpop.f32.mrb[0].mxu0
  %v765 = vpop.f32.mrb[0].mxu0
  %v766 = vadd.f32 0.0, %v765
  %v767 = vpop.f32.mrb[0].mxu0
  %768 = vmatprep.mubr.bf16.mxu0 %v349
  %769 = vmatmul.mubr.bf16.gmra.mrb[0].mxu0 %v348
  %v770 = vpop.f32.mrb[0].mxu0
  %v771 = vadd.f32 0.0, %v770
  %v772 = vpop.f32.mrb[0].mxu0
  %v773 = vpop.f32.mrb[0].mxu0
  %v774 = vadd.f32 0.0, %v773
  %v775 = vpop.f32.mrb[0].mxu0
  %776 = vmatprep.mubr.bf16.mxu0 %v353
  %777 = vmatmul.mubr.bf16.gmra.mrb[0].mxu0 %v352
  %v778 = vpop.f32.mrb[0].mxu0
  %v779 = vadd.f32 0.0, %v778
  %v780 = vpop.f32.mrb[0].mxu0
  %v781 = vpop.f32.mrb[0].mxu0
  %v782 = vadd.f32 0.0, %v781
  %v783 = vpop.f32.mrb[0].mxu0
  %784 = vmatprep.mubr.bf16.mxu0 %v357
  %785 = vmatmul.mubr.bf16.gmra.mrb[0].mxu0 %v356
  %v786 = vpop.f32.mrb[0].mxu0
  %v787 = vadd.f32 0.0, %v786
  %v788 = vpop.f32.mrb[0].mxu0
  %v789 = vpop.f32.mrb[0].mxu0
  %v790 = vadd.f32 0.0, %v789
  %v791 = vpop.f32.mrb[0].mxu0
  %792 = vmatprep.mubr.bf16.mxu0 %v361
  %793 = vmatmul.mubr.bf16.gmra.mrb[0].mxu0 %v360
  %v794 = vpop.f32.mrb[0].mxu0
  %v795 = vadd.f32 0.0, %v794
  %v796 = vpop.f32.mrb[0].mxu0
  %v797 = vpop.f32.mrb[0].mxu0
  %v798 = vadd.f32 0.0, %v797
  %v799 = vpop.f32.mrb[0].mxu0
  %800 = vmatprep.mubr.bf16.mxu0 %v365
  %801 = vmatmul.mubr.bf16.gmra.mrb[0].mxu0 %v364
  %v802 = vpop.f32.mrb[0].mxu0
  %v803 = vadd.f32 0.0, %v802
  %v804 = vpop.f32.mrb[0].mxu0
  %v805 = vpop.f32.mrb[0].mxu0
  %v806 = vadd.f32 0.0, %v805
  %v807 = vpop.f32.mrb[0].mxu0
  %808 = vmatprep.mubr.bf16.mxu0 %v369
  %809 = vmatmul.mubr.bf16.gmra.mrb[0].mxu0 %v368
  %v810 = vpop.f32.mrb[0].mxu0
  %v811 = vadd.f32 0.0, %v810
  %v812 = vpop.f32.mrb[0].mxu0
  %v813 = vpop.f32.mrb[0].mxu0
  %v814 = vadd.f32 0.0, %v813
  %v815 = vpop.f32.mrb[0].mxu0
  %816 = vmatprep.mubr.bf16.mxu0 %v373
  %817 = vmatmul.mubr.bf16.gmra.mrb[0].mxu0 %v372
  %v818 = vpop.f32.mrb[0].mxu0
  %v819 = vadd.f32 0.0, %v818
  %v820 = vpop.f32.mrb[0].mxu0
  %v821 = vpop.f32.mrb[0].mxu0
  %v822 = vadd.f32 0.0, %v821
  %v823 = vpop.f32.mrb[0].mxu0
  %824 = vmatprep.mubr.bf16.mxu0 %v377
  %825 = vmatmul.mubr.bf16.gmra.mrb[0].mxu0 %v376
  %v826 = vpop.f32.mrb[0].mxu0
  %v827 = vadd.f32 0.0, %v826
  %v828 = vpop.f32.mrb[0].mxu0
  %v829 = vpop.f32.mrb[0].mxu0
  %v830 = vadd.f32 0.0, %v829
  %v831 = vpop.f32.mrb[0].mxu0
  %832 = vmatprep.mubr.bf16.mxu0 %v381
  %833 = vmatmul.mubr.bf16.gmra.mrb[0].mxu0 %v380
  %v834 = vpop.f32.mrb[0].mxu0
  %v835 = vadd.f32 0.0, %v834
  %v836 = vpop.f32.mrb[0].mxu0
  %v837 = vpop.f32.mrb[0].mxu0
  %v838 = vadd.f32 0.0, %v837
  %v839 = vpop.f32.mrb[0].mxu0
  %840 = vmatprep.mubr.bf16.mxu0 %v385
  %841 = vmatmul.mubr.bf16.gmra.mrb[0].mxu0 %v384
  %v842 = vpop.f32.mrb[0].mxu0
  %v843 = vadd.f32 0.0, %v842
  %v844 = vpop.f32.mrb[0].mxu0
  %v845 = vpop.f32.mrb[0].mxu0
  %v846 = vadd.f32 0.0, %v845
  %v847 = vpop.f32.mrb[0].mxu0
  %848 = vmatprep.mubr.bf16.mxu0 %v389
  %849 = vmatmul.mubr.bf16.gmra.mrb[0].mxu0 %v388
  %v850 = vpop.f32.mrb[0].mxu0
  %v851 = vadd.f32 0.0, %v850
  %v852 = vpop.f32.mrb[0].mxu0
  %v853 = vpop.f32.mrb[0].mxu0
  %v854 = vadd.f32 0.0, %v853
  %v855 = vpop.f32.mrb[0].mxu0
  %856 = vmatprep.mubr.bf16.mxu0 %v393
  %857 = vmatmul.mubr.bf16.gmra.mrb[0].mxu0 %v392
  %v858 = vpop.f32.mrb[0].mxu0
  %v859 = vadd.f32 0.0, %v858
  %v860 = vpop.f32.mrb[0].mxu0
  %v861 = vpop.f32.mrb[0].mxu0
  %v862 = vadd.f32 0.0, %v861
  %v863 = vpop.f32.mrb[0].mxu0
  %864 = vmatprep.mubr.bf16.mxu0 %v397
  %865 = vmatmul.mubr.bf16.gmra.mrb[0].mxu0 %v396
  %v866 = vpop.f32.mrb[0].mxu0
  %v867 = vadd.f32 0.0, %v866
  %v868 = vpop.f32.mrb[0].mxu0
  %v869 = vpop.f32.mrb[0].mxu0
  %v870 = vadd.f32 0.0, %v869
  %v871 = vpop.f32.mrb[0].mxu0
  %872 = vmatprep.mubr.bf16.mxu0 %v401
  %873 = vmatmul.mubr.bf16.gmra.mrb[0].mxu0 %v400
  %v874 = vpop.f32.mrb[0].mxu0
  %v875 = vadd.f32 0.0, %v874
  %v876 = vpop.f32.mrb[0].mxu0
  %v877 = vpop.f32.mrb[0].mxu0
  %v878 = vadd.f32 0.0, %v877
  %v879 = vpop.f32.mrb[0].mxu0
  %880 = vmatprep.mubr.bf16.mxu0 %v405
  %881 = vmatmul.mubr.bf16.gmra.mrb[0].mxu0 %v404
  %v882 = vpop.f32.mrb[0].mxu0
  %v883 = vadd.f32 0.0, %v882
  %v884 = vpop.f32.mrb[0].mxu0
  %v885 = vpop.f32.mrb[0].mxu0
  %v886 = vadd.f32 0.0, %v885
  %v887 = vpop.f32.mrb[0].mxu0
  %888 = vdwg.mxu0
  %889 = vmatprep.subr.bf16.mxu0 0
  %890 = vmatpush1.bf16.msra.mxu0 %v552
  %891 = vmatprep.subr.bf16.mxu0 0
  %892 = vmatpush1.bf16.msra.mxu0 %v553
  %893 = vmatprep.subr.bf16.mxu0 0
  %894 = vmatpush1.bf16.msra.mxu0 %v554
  %895 = vmatprep.subr.bf16.mxu0 0
  %896 = vmatpush1.bf16.msra.mxu0 %v555
  %897 = vmatprep.subr.bf16.mxu0 0
  %898 = vmatpush1.bf16.msra.mxu0 %v556
  %899 = vmatprep.subr.bf16.mxu0 0
  %900 = vmatpush1.bf16.msra.mxu0 %v557
  %901 = vmatprep.subr.bf16.mxu0 0
  %902 = vmatpush1.bf16.msra.mxu0 %v558
  %903 = vmatprep.subr.bf16.mxu0 0
  %904 = vmatpush1.bf16.msra.mxu0 %v559
  %905 = vmatprep.subr.bf16.mxu0 0
  %906 = vmatpush1.bf16.msra.mxu0 %v560
  %907 = vmatprep.subr.bf16.mxu0 0
  %908 = vmatpush1.bf16.msra.mxu0 %v561
  %909 = vmatprep.subr.bf16.mxu0 0
  %910 = vmatpush1.bf16.msra.mxu0 %v562
  %911 = vmatprep.subr.bf16.mxu0 0
  %912 = vmatpush1.bf16.msra.mxu0 %v563
  %913 = vmatprep.subr.bf16.mxu0 0
  %914 = vmatpush1.bf16.msra.mxu0 %v564
  %915 = vmatprep.subr.bf16.mxu0 0
  %916 = vmatpush1.bf16.msra.mxu0 %v565
  %917 = vmatprep.subr.bf16.mxu0 0
  %918 = vmatpush1.bf16.msra.mxu0 %v566
  %919 = vmatprep.subr.bf16.mxu0 0
  %920 = vmatpush1.bf16.msra.mxu0 %v567
  %921 = vmatprep.mubr.bf16.mxu0 %v283
  %922 = vmatmul.mubr.bf16.gmra.mrb[0].mxu0 %v282
  %v923 = vpop.f32.mrb[0].mxu0
  %v924 = vadd.f32 %v635, %v923
  %v925 = vpop.f32.mrb[0].mxu0
  %v926 = vpop.f32.mrb[0].mxu0
  %v927 = vadd.f32 %v638, %v926
  %v928 = vpop.f32.mrb[0].mxu0
  %929 = vmatprep.mubr.bf16.mxu0 %v287
  %930 = vmatmul.mubr.bf16.gmra.mrb[0].mxu0 %v286
  %v931 = vpop.f32.mrb[0].mxu0
  %v932 = vadd.f32 %v643, %v931
  %v933 = vpop.f32.mrb[0].mxu0
  %v934 = vpop.f32.mrb[0].mxu0
  %v935 = vadd.f32 %v646, %v934
  %v936 = vpop.f32.mrb[0].mxu0
  %937 = vmatprep.mubr.bf16.mxu0 %v291
  %938 = vmatmul.mubr.bf16.gmra.mrb[0].mxu0 %v290
  %v939 = vpop.f32.mrb[0].mxu0
  %v940 = vadd.f32 %v651, %v939
  %v941 = vpop.f32.mrb[0].mxu0
  %v942 = vpop.f32.mrb[0].mxu0
  %v943 = vadd.f32 %v654, %v942
  %v944 = vpop.f32.mrb[0].mxu0
  %945 = vmatprep.mubr.bf16.mxu0 %v295
  %946 = vmatmul.mubr.bf16.gmra.mrb[0].mxu0 %v294
  %v947 = vpop.f32.mrb[0].mxu0
  %v948 = vadd.f32 %v659, %v947
  %v949 = vpop.f32.mrb[0].mxu0
  %v950 = vpop.f32.mrb[0].mxu0
  %v951 = vadd.f32 %v662, %v950
  %v952 = vpop.f32.mrb[0].mxu0
  %953 = vmatprep.mubr.bf16.mxu0 %v299
  %954 = vmatmul.mubr.bf16.gmra.mrb[0].mxu0 %v298
  %v955 = vpop.f32.mrb[0].mxu0
  %v956 = vadd.f32 %v667, %v955
  %v957 = vpop.f32.mrb[0].mxu0
  %v958 = vpop.f32.mrb[0].mxu0
  %v959 = vadd.f32 %v670, %v958
  %v960 = vpop.f32.mrb[0].mxu0
  %961 = vmatprep.mubr.bf16.mxu0 %v303
  %962 = vmatmul.mubr.bf16.gmra.mrb[0].mxu0 %v302
  %v963 = vpop.f32.mrb[0].mxu0
  %v964 = vadd.f32 %v675, %v963
  %v965 = vpop.f32.mrb[0].mxu0
  %v966 = vpop.f32.mrb[0].mxu0
  %v967 = vadd.f32 %v678, %v966
  %v968 = vpop.f32.mrb[0].mxu0
  %969 = vmatprep.mubr.bf16.mxu0 %v307
  %970 = vmatmul.mubr.bf16.gmra.mrb[0].mxu0 %v306
  %v971 = vpop.f32.mrb[0].mxu0
  %v972 = vadd.f32 %v683, %v971
  %v973 = vpop.f32.mrb[0].mxu0
  %v974 = vpop.f32.mrb[0].mxu0
  %v975 = vadd.f32 %v686, %v974
  %v976 = vpop.f32.mrb[0].mxu0
  %977 = vmatprep.mubr.bf16.mxu0 %v311
  %978 = vmatmul.mubr.bf16.gmra.mrb[0].mxu0 %v310
  %v979 = vpop.f32.mrb[0].mxu0
  %v980 = vadd.f32 %v691, %v979
  %v981 = vpop.f32.mrb[0].mxu0
  %v982 = vpop.f32.mrb[0].mxu0
  %v983 = vadd.f32 %v694, %v982
  %v984 = vpop.f32.mrb[0].mxu0
  %985 = vmatprep.mubr.bf16.mxu0 %v315
  %986 = vmatmul.mubr.bf16.gmra.mrb[0].mxu0 %v314
  %v987 = vpop.f32.mrb[0].mxu0
  %v988 = vadd.f32 %v699, %v987
  %v989 = vpop.f32.mrb[0].mxu0
  %v990 = vpop.f32.mrb[0].mxu0
  %v991 = vadd.f32 %v702, %v990
  %v992 = vpop.f32.mrb[0].mxu0
  %993 = vmatprep.mubr.bf16.mxu0 %v319
  %994 = vmatmul.mubr.bf16.gmra.mrb[0].mxu0 %v318
  %v995 = vpop.f32.mrb[0].mxu0
  %v996 = vadd.f32 %v707, %v995
  %v997 = vpop.f32.mrb[0].mxu0
  %v998 = vpop.f32.mrb[0].mxu0
  %v999 = vadd.f32 %v710, %v998
  %v1000 = vpop.f32.mrb[0].mxu0
  %1001 = vmatprep.mubr.bf16.mxu0 %v323
  %1002 = vmatmul.mubr.bf16.gmra.mrb[0].mxu0 %v322
  %v1003 = vpop.f32.mrb[0].mxu0
  %v1004 = vadd.f32 %v715, %v1003
  %v1005 = vpop.f32.mrb[0].mxu0
  %v1006 = vpop.f32.mrb[0].mxu0
  %v1007 = vadd.f32 %v718, %v1006
  %v1008 = vpop.f32.mrb[0].mxu0
  %1009 = vmatprep.mubr.bf16.mxu0 %v327
  %1010 = vmatmul.mubr.bf16.gmra.mrb[0].mxu0 %v326
  %v1011 = vpop.f32.mrb[0].mxu0
  %v1012 = vadd.f32 %v723, %v1011
  %v1013 = vpop.f32.mrb[0].mxu0
  %v1014 = vpop.f32.mrb[0].mxu0
  %v1015 = vadd.f32 %v726, %v1014
  %v1016 = vpop.f32.mrb[0].mxu0
  %1017 = vmatprep.mubr.bf16.mxu0 %v331
  %1018 = vmatmul.mubr.bf16.gmra.mrb[0].mxu0 %v330
  %v1019 = vpop.f32.mrb[0].mxu0
  %v1020 = vadd.f32 %v731, %v1019
  %v1021 = vpop.f32.mrb[0].mxu0
  %v1022 = vpop.f32.mrb[0].mxu0
  %v1023 = vadd.f32 %v734, %v1022
  %v1024 = vpop.f32.mrb[0].mxu0
  %1025 = vmatprep.mubr.bf16.mxu0 %v335
  %1026 = vmatmul.mubr.bf16.gmra.mrb[0].mxu0 %v334
  %v1027 = vpop.f32.mrb[0].mxu0
  %v1028 = vadd.f32 %v739, %v1027
  %v1029 = vpop.f32.mrb[0].mxu0
  %v1030 = vpop.f32.mrb[0].mxu0
  %v1031 = vadd.f32 %v742, %v1030
  %v1032 = vpop.f32.mrb[0].mxu0
  %1033 = vmatprep.mubr.bf16.mxu0 %v339
  %1034 = vmatmul.mubr.bf16.gmra.mrb[0].mxu0 %v338
  %v1035 = vpop.f32.mrb[0].mxu0
  %v1036 = vadd.f32 %v747, %v1035
  %v1037 = vpop.f32.mrb[0].mxu0
  %v1038 = vpop.f32.mrb[0].mxu0
  %v1039 = vadd.f32 %v750, %v1038
  %v1040 = vpop.f32.mrb[0].mxu0
  %1041 = vmatprep.mubr.bf16.mxu0 %v343
  %1042 = vmatmul.mubr.bf16.gmra.mrb[0].mxu0 %v342
  %v1043 = vpop.f32.mrb[0].mxu0
  %v1044 = vadd.f32 %v755, %v1043
  %v1045 = vpop.f32.mrb[0].mxu0
  %v1046 = vpop.f32.mrb[0].mxu0
  %v1047 = vadd.f32 %v758, %v1046
  %v1048 = vpop.f32.mrb[0].mxu0
  %1049 = vmatprep.mubr.bf16.mxu0 %v347
  %1050 = vmatmul.mubr.bf16.gmra.mrb[0].mxu0 %v346
  %v1051 = vpop.f32.mrb[0].mxu0
  %v1052 = vadd.f32 %v763, %v1051
  %v1053 = vpop.f32.mrb[0].mxu0
  %v1054 = vpop.f32.mrb[0].mxu0
  %v1055 = vadd.f32 %v766, %v1054
  %v1056 = vpop.f32.mrb[0].mxu0
  %1057 = vmatprep.mubr.bf16.mxu0 %v351
  %1058 = vmatmul.mubr.bf16.gmra.mrb[0].mxu0 %v350
  %v1059 = vpop.f32.mrb[0].mxu0
  %v1060 = vadd.f32 %v771, %v1059
  %v1061 = vpop.f32.mrb[0].mxu0
  %v1062 = vpop.f32.mrb[0].mxu0
  %v1063 = vadd.f32 %v774, %v1062
  %v1064 = vpop.f32.mrb[0].mxu0
  %1065 = vmatprep.mubr.bf16.mxu0 %v355
  %1066 = vmatmul.mubr.bf16.gmra.mrb[0].mxu0 %v354
  %v1067 = vpop.f32.mrb[0].mxu0
  %v1068 = vadd.f32 %v779, %v1067
  %v1069 = vpop.f32.mrb[0].mxu0
  %v1070 = vpop.f32.mrb[0].mxu0
  %v1071 = vadd.f32 %v782, %v1070
  %v1072 = vpop.f32.mrb[0].mxu0
  %1073 = vmatprep.mubr.bf16.mxu0 %v359
  %1074 = vmatmul.mubr.bf16.gmra.mrb[0].mxu0 %v358
  %v1075 = vpop.f32.mrb[0].mxu0
  %v1076 = vadd.f32 %v787, %v1075
  %v1077 = vpop.f32.mrb[0].mxu0
  %v1078 = vpop.f32.mrb[0].mxu0
  %v1079 = vadd.f32 %v790, %v1078
  %v1080 = vpop.f32.mrb[0].mxu0
  %1081 = vmatprep.mubr.bf16.mxu0 %v363
  %1082 = vmatmul.mubr.bf16.gmra.mrb[0].mxu0 %v362
  %v1083 = vpop.f32.mrb[0].mxu0
  %v1084 = vadd.f32 %v795, %v1083
  %v1085 = vpop.f32.mrb[0].mxu0
  %v1086 = vpop.f32.mrb[0].mxu0
  %v1087 = vadd.f32 %v798, %v1086
  %v1088 = vpop.f32.mrb[0].mxu0
  %1089 = vmatprep.mubr.bf16.mxu0 %v367
  %1090 = vmatmul.mubr.bf16.gmra.mrb[0].mxu0 %v366
  %v1091 = vpop.f32.mrb[0].mxu0
  %v1092 = vadd.f32 %v803, %v1091
  %v1093 = vpop.f32.mrb[0].mxu0
  %v1094 = vpop.f32.mrb[0].mxu0
  %v1095 = vadd.f32 %v806, %v1094
  %v1096 = vpop.f32.mrb[0].mxu0
  %1097 = vmatprep.mubr.bf16.mxu0 %v371
  %1098 = vmatmul.mubr.bf16.gmra.mrb[0].mxu0 %v370
  %v1099 = vpop.f32.mrb[0].mxu0
  %v1100 = vadd.f32 %v811, %v1099
  %v1101 = vpop.f32.mrb[0].mxu0
  %v1102 = vpop.f32.mrb[0].mxu0
  %v1103 = vadd.f32 %v814, %v1102
  %v1104 = vpop.f32.mrb[0].mxu0
  %1105 = vmatprep.mubr.bf16.mxu0 %v375
  %1106 = vmatmul.mubr.bf16.gmra.mrb[0].mxu0 %v374
  %v1107 = vpop.f32.mrb[0].mxu0
  %v1108 = vadd.f32 %v819, %v1107
  %v1109 = vpop.f32.mrb[0].mxu0
  %v1110 = vpop.f32.mrb[0].mxu0
  %v1111 = vadd.f32 %v822, %v1110
  %v1112 = vpop.f32.mrb[0].mxu0
  %1113 = vmatprep.mubr.bf16.mxu0 %v379
  %1114 = vmatmul.mubr.bf16.gmra.mrb[0].mxu0 %v378
  %v1115 = vpop.f32.mrb[0].mxu0
  %v1116 = vadd.f32 %v827, %v1115
  %v1117 = vpop.f32.mrb[0].mxu0
  %v1118 = vpop.f32.mrb[0].mxu0
  %v1119 = vadd.f32 %v830, %v1118
  %v1120 = vpop.f32.mrb[0].mxu0
  %1121 = vmatprep.mubr.bf16.mxu0 %v383
  %1122 = vmatmul.mubr.bf16.gmra.mrb[0].mxu0 %v382
  %v1123 = vpop.f32.mrb[0].mxu0
  %v1124 = vadd.f32 %v835, %v1123
  %v1125 = vpop.f32.mrb[0].mxu0
  %v1126 = vpop.f32.mrb[0].mxu0
  %v1127 = vadd.f32 %v838, %v1126
  %v1128 = vpop.f32.mrb[0].mxu0
  %1129 = vmatprep.mubr.bf16.mxu0 %v387
  %1130 = vmatmul.mubr.bf16.gmra.mrb[0].mxu0 %v386
  %v1131 = vpop.f32.mrb[0].mxu0
  %v1132 = vadd.f32 %v843, %v1131
  %v1133 = vpop.f32.mrb[0].mxu0
  %v1134 = vpop.f32.mrb[0].mxu0
  %v1135 = vadd.f32 %v846, %v1134
  %v1136 = vpop.f32.mrb[0].mxu0
  %1137 = vmatprep.mubr.bf16.mxu0 %v391
  %1138 = vmatmul.mubr.bf16.gmra.mrb[0].mxu0 %v390
  %v1139 = vpop.f32.mrb[0].mxu0
  %v1140 = vadd.f32 %v851, %v1139
  %v1141 = vpop.f32.mrb[0].mxu0
  %v1142 = vpop.f32.mrb[0].mxu0
  %v1143 = vadd.f32 %v854, %v1142
  %v1144 = vpop.f32.mrb[0].mxu0
  %1145 = vmatprep.mubr.bf16.mxu0 %v395
  %1146 = vmatmul.mubr.bf16.gmra.mrb[0].mxu0 %v394
  %v1147 = vpop.f32.mrb[0].mxu0
  %v1148 = vadd.f32 %v859, %v1147
  %v1149 = vpop.f32.mrb[0].mxu0
  %v1150 = vpop.f32.mrb[0].mxu0
  %v1151 = vadd.f32 %v862, %v1150
  %v1152 = vpop.f32.mrb[0].mxu0
  %1153 = vmatprep.mubr.bf16.mxu0 %v399
  %1154 = vmatmul.mubr.bf16.gmra.mrb[0].mxu0 %v398
  %v1155 = vpop.f32.mrb[0].mxu0
  %v1156 = vadd.f32 %v867, %v1155
  %v1157 = vpop.f32.mrb[0].mxu0
  %v1158 = vpop.f32.mrb[0].mxu0
  %v1159 = vadd.f32 %v870, %v1158
  %v1160 = vpop.f32.mrb[0].mxu0
  %1161 = vmatprep.mubr.bf16.mxu0 %v403
  %1162 = vmatmul.mubr.bf16.gmra.mrb[0].mxu0 %v402
  %v1163 = vpop.f32.mrb[0].mxu0
  %v1164 = vadd.f32 %v875, %v1163
  %v1165 = vpop.f32.mrb[0].mxu0
  %v1166 = vpop.f32.mrb[0].mxu0
  %v1167 = vadd.f32 %v878, %v1166
  %v1168 = vpop.f32.mrb[0].mxu0
  %1169 = vmatprep.mubr.bf16.mxu0 %v407
  %1170 = vmatmul.mubr.bf16.gmra.mrb[0].mxu0 %v406
  %v1171 = vpop.f32.mrb[0].mxu0
  %v1172 = vadd.f32 %v883, %v1171
  %v1173 = vpop.f32.mrb[0].mxu0
  %v1174 = vpop.f32.mrb[0].mxu0
  %v1175 = vadd.f32 %v886, %v1174
  %v1176 = vpop.f32.mrb[0].mxu0
  %1177 = vdwg.mxu0
  %v1178 = vadd.f32 %v152, %v924
  %v1179 = vadd.f32 %v153, %v927
  %v1180 = vadd.f32 %v154, %v932
  %v1181 = vadd.f32 %v155, %v935
  %v1182 = vadd.f32 %v156, %v940
  %v1183 = vadd.f32 %v157, %v943
  %v1184 = vadd.f32 %v158, %v948
  %v1185 = vadd.f32 %v159, %v951
  %v1186 = vadd.f32 %v160, %v956
  %v1187 = vadd.f32 %v161, %v959
  %v1188 = vadd.f32 %v162, %v964
  %v1189 = vadd.f32 %v163, %v967
  %v1190 = vadd.f32 %v164, %v972
  %v1191 = vadd.f32 %v165, %v975
  %v1192 = vadd.f32 %v166, %v980
  %v1193 = vadd.f32 %v167, %v983
  %v1194 = vadd.f32 %v168, %v988
  %v1195 = vadd.f32 %v169, %v991
  %v1196 = vadd.f32 %v170, %v996
  %v1197 = vadd.f32 %v171, %v999
  %v1198 = vadd.f32 %v172, %v1004
  %v1199 = vadd.f32 %v173, %v1007
  %v1200 = vadd.f32 %v174, %v1012
  %v1201 = vadd.f32 %v175, %v1015
  %v1202 = vadd.f32 %v176, %v1020
  %v1203 = vadd.f32 %v177, %v1023
  %v1204 = vadd.f32 %v178, %v1028
  %v1205 = vadd.f32 %v179, %v1031
  %v1206 = vadd.f32 %v180, %v1036
  %v1207 = vadd.f32 %v181, %v1039
  %v1208 = vadd.f32 %v182, %v1044
  %v1209 = vadd.f32 %v183, %v1047
  %v1210 = vadd.f32 %v184, %v1052
  %v1211 = vadd.f32 %v185, %v1055
  %v1212 = vadd.f32 %v186, %v1060
  %v1213 = vadd.f32 %v187, %v1063
  %v1214 = vadd.f32 %v188, %v1068
  %v1215 = vadd.f32 %v189, %v1071
  %v1216 = vadd.f32 %v190, %v1076
  %v1217 = vadd.f32 %v191, %v1079
  %v1218 = vadd.f32 %v192, %v1084
  %v1219 = vadd.f32 %v193, %v1087
  %v1220 = vadd.f32 %v194, %v1092
  %v1221 = vadd.f32 %v195, %v1095
  %v1222 = vadd.f32 %v196, %v1100
  %v1223 = vadd.f32 %v197, %v1103
  %v1224 = vadd.f32 %v198, %v1108
  %v1225 = vadd.f32 %v199, %v1111
  %v1226 = vadd.f32 %v200, %v1116
  %v1227 = vadd.f32 %v201, %v1119
  %v1228 = vadd.f32 %v202, %v1124
  %v1229 = vadd.f32 %v203, %v1127
  %v1230 = vadd.f32 %v204, %v1132
  %v1231 = vadd.f32 %v205, %v1135
  %v1232 = vadd.f32 %v206, %v1140
  %v1233 = vadd.f32 %v207, %v1143
  %v1234 = vadd.f32 %v208, %v1148
  %v1235 = vadd.f32 %v209, %v1151
  %v1236 = vadd.f32 %v210, %v1156
  %v1237 = vadd.f32 %v211, %v1159
  %v1238 = vadd.f32 %v212, %v1164
  %v1239 = vadd.f32 %v213, %v1167
  %v1240 = vadd.f32 %v214, %v1172
  %v1241 = vadd.f32 %v215, %v1175
  %1242 = vst [vmem:[#allocation2] sm:$0xff] %v1178
  %1243 = vst [vmem:[#allocation2 + $0x8] sm:$0xff] %v1179
  %1244 = vst [vmem:[#allocation2 + $0x10] sm:$0xff] %v1180
  %1245 = vst [vmem:[#allocation2 + $0x18] sm:$0xff] %v1181
  %1246 = vst [vmem:[#allocation2 + $0x20] sm:$0xff] %v1182
  %1247 = vst [vmem:[#allocation2 + $0x28] sm:$0xff] %v1183
  %1248 = vst [vmem:[#allocation2 + $0x30] sm:$0xff] %v1184
  %1249 = vst [vmem:[#allocation2 + $0x38] sm:$0xff] %v1185
  %1250 = vst [vmem:[#allocation2 + $0x40] sm:$0xff] %v1186
  %1251 = vst [vmem:[#allocation2 + $0x48] sm:$0xff] %v1187
  %1252 = vst [vmem:[#allocation2 + $0x50] sm:$0xff] %v1188
  %1253 = vst [vmem:[#allocation2 + $0x58] sm:$0xff] %v1189
  %1254 = vst [vmem:[#allocation2 + $0x60] sm:$0xff] %v1190
  %1255 = vst [vmem:[#allocation2 + $0x68] sm:$0xff] %v1191
  %1256 = vst [vmem:[#allocation2 + $0x70] sm:$0xff] %v1192
  %1257 = vst [vmem:[#allocation2 + $0x78] sm:$0xff] %v1193
  %1258 = vst [vmem:[#allocation2 + $0x80] sm:$0xff] %v1194
  %1259 = vst [vmem:[#allocation2 + $0x88] sm:$0xff] %v1195
  %1260 = vst [vmem:[#allocation2 + $0x90] sm:$0xff] %v1196
  %1261 = vst [vmem:[#allocation2 + $0x98] sm:$0xff] %v1197
  %1262 = vst [vmem:[#allocation2 + $0xa0] sm:$0xff] %v1198
  %1263 = vst [vmem:[#allocation2 + $0xa8] sm:$0xff] %v1199
  %1264 = vst [vmem:[#allocation2 + $0xb0] sm:$0xff] %v1200
  %1265 = vst [vmem:[#allocation2 + $0xb8] sm:$0xff] %v1201
  %1266 = vst [vmem:[#allocation2 + $0xc0] sm:$0xff] %v1202
  %1267 = vst [vmem:[#allocation2 + $0xc8] sm:$0xff] %v1203
  %1268 = vst [vmem:[#allocation2 + $0xd0] sm:$0xff] %v1204
  %1269 = vst [vmem:[#allocation2 + $0xd8] sm:$0xff] %v1205
  %1270 = vst [vmem:[#allocation2 + $0xe0] sm:$0xff] %v1206
  %1271 = vst [vmem:[#allocation2 + $0xe8] sm:$0xff] %v1207
  %1272 = vst [vmem:[#allocation2 + $0xf0] sm:$0xff] %v1208
  %1273 = vst [vmem:[#allocation2 + $0xf8] sm:$0xff] %v1209
  %1274 = vst [vmem:[#allocation2 + $0x100] sm:$0xff] %v1210
  %1275 = vst [vmem:[#allocation2 + $0x108] sm:$0xff] %v1211
  %1276 = vst [vmem:[#allocation2 + $0x110] sm:$0xff] %v1212
  %1277 = vst [vmem:[#allocation2 + $0x118] sm:$0xff] %v1213
  %1278 = vst [vmem:[#allocation2 + $0x120] sm:$0xff] %v1214
  %1279 = vst [vmem:[#allocation2 + $0x128] sm:$0xff] %v1215
  %1280 = vst [vmem:[#allocation2 + $0x130] sm:$0xff] %v1216
  %1281 = vst [vmem:[#allocation2 + $0x138] sm:$0xff] %v1217
  %1282 = vst [vmem:[#allocation2 + $0x140] sm:$0xff] %v1218
  %1283 = vst [vmem:[#allocation2 + $0x148] sm:$0xff] %v1219
  %1284 = vst [vmem:[#allocation2 + $0x150] sm:$0xff] %v1220
  %1285 = vst [vmem:[#allocation2 + $0x158] sm:$0xff] %v1221
  %1286 = vst [vmem:[#allocation2 + $0x160] sm:$0xff] %v1222
  %1287 = vst [vmem:[#allocation2 + $0x168] sm:$0xff] %v1223
  %1288 = vst [vmem:[#allocation2 + $0x170] sm:$0xff] %v1224
  %1289 = vst [vmem:[#allocation2 + $0x178] sm:$0xff] %v1225
  %1290 = vst [vmem:[#allocation2 + $0x180] sm:$0xff] %v1226
  %1291 = vst [vmem:[#allocation2 + $0x188] sm:$0xff] %v1227
  %1292 = vst [vmem:[#allocation2 + $0x190] sm:$0xff] %v1228
  %1293 = vst [vmem:[#allocation2 + $0x198] sm:$0xff] %v1229
  %1294 = vst [vmem:[#allocation2 + $0x1a0] sm:$0xff] %v1230
  %1295 = vst [vmem:[#allocation2 + $0x1a8] sm:$0xff] %v1231
  %1296 = vst [vmem:[#allocation2 + $0x1b0] sm:$0xff] %v1232
  %1297 = vst [vmem:[#allocation2 + $0x1b8] sm:$0xff] %v1233
  %1298 = vst [vmem:[#allocation2 + $0x1c0] sm:$0xff] %v1234
  %1299 = vst [vmem:[#allocation2 + $0x1c8] sm:$0xff] %v1235
  %1300 = vst [vmem:[#allocation2 + $0x1d0] sm:$0xff] %v1236
  %1301 = vst [vmem:[#allocation2 + $0x1d8] sm:$0xff] %v1237
  %1302 = vst [vmem:[#allocation2 + $0x1e0] sm:$0xff] %v1238
  %1303 = vst [vmem:[#allocation2 + $0x1e8] sm:$0xff] %v1239
  %1304 = vst [vmem:[#allocation2 + $0x1f0] sm:$0xff] %v1240
  %1305 = vst [vmem:[#allocation2 + $0x1f8] sm:$0xff] %v1241
  // Predicated region
  $region18: #{gcn_node_apply_forward.1} parent=0 // pred_check
    %p1306 = pneg %p15
  $region19: #{gcn_node_apply_forward.1} parent=0 // pred_check_branch
    %1308 = sbr.rel (%p1306) target = $region21
  $region20: #{gcn_node_apply_forward.1} parent=0 // pred_region
    %v1309 = vld [vmem:[#allocation2] sm:$0xff]
    %v1310 = vld [vmem:[#allocation2 + $0x8] sm:$0xff]
    %v1311 = vld [vmem:[#allocation2 + $0x10] sm:$0xff]
    %v1312 = vld [vmem:[#allocation2 + $0x18] sm:$0xff]
    %v1313 = vld [vmem:[#allocation2 + $0x20] sm:$0xff]
    %v1314 = vld [vmem:[#allocation2 + $0x28] sm:$0xff]
    %v1315 = vld [vmem:[#allocation2 + $0x30] sm:$0xff]
    %v1316 = vld [vmem:[#allocation2 + $0x38] sm:$0xff]
    %v1317 = vld [vmem:[#allocation2 + $0x40] sm:$0xff]
    %v1318 = vld [vmem:[#allocation2 + $0x48] sm:$0xff]
    %v1319 = vld [vmem:[#allocation2 + $0x50] sm:$0xff]
    %v1320 = vld [vmem:[#allocation2 + $0x58] sm:$0xff]
    %v1321 = vld [vmem:[#allocation2 + $0x60] sm:$0xff]
    %v1322 = vld [vmem:[#allocation2 + $0x68] sm:$0xff]
    %v1323 = vld [vmem:[#allocation2 + $0x70] sm:$0xff]
    %v1324 = vld [vmem:[#allocation2 + $0x78] sm:$0xff]
    %v1325 = vld [vmem:[#allocation2 + $0x80] sm:$0xff]
    %v1326 = vld [vmem:[#allocation2 + $0x88] sm:$0xff]
    %v1327 = vld [vmem:[#allocation2 + $0x90] sm:$0xff]
    %v1328 = vld [vmem:[#allocation2 + $0x98] sm:$0xff]
    %v1329 = vld [vmem:[#allocation2 + $0xa0] sm:$0xff]
    %v1330 = vld [vmem:[#allocation2 + $0xa8] sm:$0xff]
    %v1331 = vld [vmem:[#allocation2 + $0xb0] sm:$0xff]
    %v1332 = vld [vmem:[#allocation2 + $0xb8] sm:$0xff]
    %v1333 = vld [vmem:[#allocation2 + $0xc0] sm:$0xff]
    %v1334 = vld [vmem:[#allocation2 + $0xc8] sm:$0xff]
    %v1335 = vld [vmem:[#allocation2 + $0xd0] sm:$0xff]
    %v1336 = vld [vmem:[#allocation2 + $0xd8] sm:$0xff]
    %v1337 = vld [vmem:[#allocation2 + $0xe0] sm:$0xff]
    %v1338 = vld [vmem:[#allocation2 + $0xe8] sm:$0xff]
    %v1339 = vld [vmem:[#allocation2 + $0xf0] sm:$0xff]
    %v1340 = vld [vmem:[#allocation2 + $0xf8] sm:$0xff]
    %v1341 = vld [vmem:[#allocation2 + $0x100] sm:$0xff]
    %v1342 = vld [vmem:[#allocation2 + $0x108] sm:$0xff]
    %v1343 = vld [vmem:[#allocation2 + $0x110] sm:$0xff]
    %v1344 = vld [vmem:[#allocation2 + $0x118] sm:$0xff]
    %v1345 = vld [vmem:[#allocation2 + $0x120] sm:$0xff]
    %v1346 = vld [vmem:[#allocation2 + $0x128] sm:$0xff]
    %v1347 = vld [vmem:[#allocation2 + $0x130] sm:$0xff]
    %v1348 = vld [vmem:[#allocation2 + $0x138] sm:$0xff]
    %v1349 = vld [vmem:[#allocation2 + $0x140] sm:$0xff]
    %v1350 = vld [vmem:[#allocation2 + $0x148] sm:$0xff]
    %v1351 = vld [vmem:[#allocation2 + $0x150] sm:$0xff]
    %v1352 = vld [vmem:[#allocation2 + $0x158] sm:$0xff]
    %v1353 = vld [vmem:[#allocation2 + $0x160] sm:$0xff]
    %v1354 = vld [vmem:[#allocation2 + $0x168] sm:$0xff]
    %v1355 = vld [vmem:[#allocation2 + $0x170] sm:$0xff]
    %v1356 = vld [vmem:[#allocation2 + $0x178] sm:$0xff]
    %v1357 = vld [vmem:[#allocation2 + $0x180] sm:$0xff]
    %v1358 = vld [vmem:[#allocation2 + $0x188] sm:$0xff]
    %v1359 = vld [vmem:[#allocation2 + $0x190] sm:$0xff]
    %v1360 = vld [vmem:[#allocation2 + $0x198] sm:$0xff]
    %v1361 = vld [vmem:[#allocation2 + $0x1a0] sm:$0xff]
    %v1362 = vld [vmem:[#allocation2 + $0x1a8] sm:$0xff]
    %v1363 = vld [vmem:[#allocation2 + $0x1b0] sm:$0xff]
    %v1364 = vld [vmem:[#allocation2 + $0x1b8] sm:$0xff]
    %v1365 = vld [vmem:[#allocation2 + $0x1c0] sm:$0xff]
    %v1366 = vld [vmem:[#allocation2 + $0x1c8] sm:$0xff]
    %v1367 = vld [vmem:[#allocation2 + $0x1d0] sm:$0xff]
    %v1368 = vld [vmem:[#allocation2 + $0x1d8] sm:$0xff]
    %v1369 = vld [vmem:[#allocation2 + $0x1e0] sm:$0xff]
    %v1370 = vld [vmem:[#allocation2 + $0x1e8] sm:$0xff]
    %v1371 = vld [vmem:[#allocation2 + $0x1f0] sm:$0xff]
    %v1372 = vld [vmem:[#allocation2 + $0x1f8] sm:$0xff]
    %v1373 = vld [vmem:[%s2] sm:$0x1]
    %v1375 = vlaneseq
    %v1376 = vshrl.u32 %v1375, 7
    %v1377 = vsub.s32 0, %v1376
    %v1378 = vrot.slane %v1373, %v1377
    %v1380 = vadd.f32 %v1309, %v1378
    %v1381 = vadd.f32 %v1310, %v1378
    %v1382 = vadd.f32 %v1311, %v1378
    %v1383 = vadd.f32 %v1312, %v1378
    %v1384 = vadd.f32 %v1313, %v1378
    %v1385 = vadd.f32 %v1314, %v1378
    %v1386 = vadd.f32 %v1315, %v1378
    %v1387 = vadd.f32 %v1316, %v1378
    %v1388 = vadd.f32 %v1317, %v1378
    %v1389 = vadd.f32 %v1318, %v1378
    %v1390 = vadd.f32 %v1319, %v1378
    %v1391 = vadd.f32 %v1320, %v1378
    %v1392 = vadd.f32 %v1321, %v1378
    %v1393 = vadd.f32 %v1322, %v1378
    %v1394 = vadd.f32 %v1323, %v1378
    %v1395 = vadd.f32 %v1324, %v1378
    %v1396 = vadd.f32 %v1325, %v1378
    %v1397 = vadd.f32 %v1326, %v1378
    %v1398 = vadd.f32 %v1327, %v1378
    %v1399 = vadd.f32 %v1328, %v1378
    %v1400 = vadd.f32 %v1329, %v1378
    %v1401 = vadd.f32 %v1330, %v1378
    %v1402 = vadd.f32 %v1331, %v1378
    %v1403 = vadd.f32 %v1332, %v1378
    %v1404 = vadd.f32 %v1333, %v1378
    %v1405 = vadd.f32 %v1334, %v1378
    %v1406 = vadd.f32 %v1335, %v1378
    %v1407 = vadd.f32 %v1336, %v1378
    %v1408 = vadd.f32 %v1337, %v1378
    %v1409 = vadd.f32 %v1338, %v1378
    %v1410 = vadd.f32 %v1339, %v1378
    %v1411 = vadd.f32 %v1340, %v1378
    %v1412 = vadd.f32 %v1341, %v1378
    %v1413 = vadd.f32 %v1342, %v1378
    %v1414 = vadd.f32 %v1343, %v1378
    %v1415 = vadd.f32 %v1344, %v1378
    %v1416 = vadd.f32 %v1345, %v1378
    %v1417 = vadd.f32 %v1346, %v1378
    %v1418 = vadd.f32 %v1347, %v1378
    %v1419 = vadd.f32 %v1348, %v1378
    %v1420 = vadd.f32 %v1349, %v1378
    %v1421 = vadd.f32 %v1350, %v1378
    %v1422 = vadd.f32 %v1351, %v1378
    %v1423 = vadd.f32 %v1352, %v1378
    %v1424 = vadd.f32 %v1353, %v1378
    %v1425 = vadd.f32 %v1354, %v1378
    %v1426 = vadd.f32 %v1355, %v1378
    %v1427 = vadd.f32 %v1356, %v1378
    %v1428 = vadd.f32 %v1357, %v1378
    %v1429 = vadd.f32 %v1358, %v1378
    %v1430 = vadd.f32 %v1359, %v1378
    %v1431 = vadd.f32 %v1360, %v1378
    %v1432 = vadd.f32 %v1361, %v1378
    %v1433 = vadd.f32 %v1362, %v1378
    %v1434 = vadd.f32 %v1363, %v1378
    %v1435 = vadd.f32 %v1364, %v1378
    %v1436 = vadd.f32 %v1365, %v1378
    %v1437 = vadd.f32 %v1366, %v1378
    %v1438 = vadd.f32 %v1367, %v1378
    %v1439 = vadd.f32 %v1368, %v1378
    %v1440 = vadd.f32 %v1369, %v1378
    %v1441 = vadd.f32 %v1370, %v1378
    %v1442 = vadd.f32 %v1371, %v1378
    %v1443 = vadd.f32 %v1372, %v1378
    %1444 = vst [vmem:[%s3] sm:$0xff] %v1380
    %1445 = vst [vmem:[%s3 + $0x8] sm:$0xff] %v1381
    %1446 = vst [vmem:[%s3 + $0x10] sm:$0xff] %v1382
    %1447 = vst [vmem:[%s3 + $0x18] sm:$0xff] %v1383
    %1448 = vst [vmem:[%s3 + $0x20] sm:$0xff] %v1384
    %1449 = vst [vmem:[%s3 + $0x28] sm:$0xff] %v1385
    %1450 = vst [vmem:[%s3 + $0x30] sm:$0xff] %v1386
    %1451 = vst [vmem:[%s3 + $0x38] sm:$0xff] %v1387
    %1452 = vst [vmem:[%s3 + $0x40] sm:$0xff] %v1388
    %1453 = vst [vmem:[%s3 + $0x48] sm:$0xff] %v1389
    %1454 = vst [vmem:[%s3 + $0x50] sm:$0xff] %v1390
    %1455 = vst [vmem:[%s3 + $0x58] sm:$0xff] %v1391
    %1456 = vst [vmem:[%s3 + $0x60] sm:$0xff] %v1392
    %1457 = vst [vmem:[%s3 + $0x68] sm:$0xff] %v1393
    %1458 = vst [vmem:[%s3 + $0x70] sm:$0xff] %v1394
    %1459 = vst [vmem:[%s3 + $0x78] sm:$0xff] %v1395
    %1460 = vst [vmem:[%s3 + $0x80] sm:$0xff] %v1396
    %1461 = vst [vmem:[%s3 + $0x88] sm:$0xff] %v1397
    %1462 = vst [vmem:[%s3 + $0x90] sm:$0xff] %v1398
    %1463 = vst [vmem:[%s3 + $0x98] sm:$0xff] %v1399
    %1464 = vst [vmem:[%s3 + $0xa0] sm:$0xff] %v1400
    %1465 = vst [vmem:[%s3 + $0xa8] sm:$0xff] %v1401
    %1466 = vst [vmem:[%s3 + $0xb0] sm:$0xff] %v1402
    %1467 = vst [vmem:[%s3 + $0xb8] sm:$0xff] %v1403
    %1468 = vst [vmem:[%s3 + $0xc0] sm:$0xff] %v1404
    %1469 = vst [vmem:[%s3 + $0xc8] sm:$0xff] %v1405
    %1470 = vst [vmem:[%s3 + $0xd0] sm:$0xff] %v1406
    %1471 = vst [vmem:[%s3 + $0xd8] sm:$0xff] %v1407
    %1472 = vst [vmem:[%s3 + $0xe0] sm:$0xff] %v1408
    %1473 = vst [vmem:[%s3 + $0xe8] sm:$0xff] %v1409
    %1474 = vst [vmem:[%s3 + $0xf0] sm:$0xff] %v1410
    %1475 = vst [vmem:[%s3 + $0xf8] sm:$0xff] %v1411
    %1476 = vst [vmem:[%s3 + $0x100] sm:$0xff] %v1412
    %1477 = vst [vmem:[%s3 + $0x108] sm:$0xff] %v1413
    %1478 = vst [vmem:[%s3 + $0x110] sm:$0xff] %v1414
    %1479 = vst [vmem:[%s3 + $0x118] sm:$0xff] %v1415
    %1480 = vst [vmem:[%s3 + $0x120] sm:$0xff] %v1416
    %1481 = vst [vmem:[%s3 + $0x128] sm:$0xff] %v1417
    %1482 = vst [vmem:[%s3 + $0x130] sm:$0xff] %v1418
    %1483 = vst [vmem:[%s3 + $0x138] sm:$0xff] %v1419
    %1484 = vst [vmem:[%s3 + $0x140] sm:$0xff] %v1420
    %1485 = vst [vmem:[%s3 + $0x148] sm:$0xff] %v1421
    %1486 = vst [vmem:[%s3 + $0x150] sm:$0xff] %v1422
    %1487 = vst [vmem:[%s3 + $0x158] sm:$0xff] %v1423
    %1488 = vst [vmem:[%s3 + $0x160] sm:$0xff] %v1424
    %1489 = vst [vmem:[%s3 + $0x168] sm:$0xff] %v1425
    %1490 = vst [vmem:[%s3 + $0x170] sm:$0xff] %v1426
    %1491 = vst [vmem:[%s3 + $0x178] sm:$0xff] %v1427
    %1492 = vst [vmem:[%s3 + $0x180] sm:$0xff] %v1428
    %1493 = vst [vmem:[%s3 + $0x188] sm:$0xff] %v1429
    %1494 = vst [vmem:[%s3 + $0x190] sm:$0xff] %v1430
    %1495 = vst [vmem:[%s3 + $0x198] sm:$0xff] %v1431
    %1496 = vst [vmem:[%s3 + $0x1a0] sm:$0xff] %v1432
    %1497 = vst [vmem:[%s3 + $0x1a8] sm:$0xff] %v1433
    %1498 = vst [vmem:[%s3 + $0x1b0] sm:$0xff] %v1434
    %1499 = vst [vmem:[%s3 + $0x1b8] sm:$0xff] %v1435
    %1500 = vst [vmem:[%s3 + $0x1c0] sm:$0xff] %v1436
    %1501 = vst [vmem:[%s3 + $0x1c8] sm:$0xff] %v1437
    %1502 = vst [vmem:[%s3 + $0x1d0] sm:$0xff] %v1438
    %1503 = vst [vmem:[%s3 + $0x1d8] sm:$0xff] %v1439
    %1504 = vst [vmem:[%s3 + $0x1e0] sm:$0xff] %v1440
    %1505 = vst [vmem:[%s3 + $0x1e8] sm:$0xff] %v1441
    %1506 = vst [vmem:[%s3 + $0x1f0] sm:$0xff] %v1442
    %1507 = vst [vmem:[%s3 + $0x1f8] sm:$0xff] %v1443
  $region21: #{gcn_node_apply_forward.1} parent=0 // pred_fallthru
    _
  // Predicated region
  $region22: #{gcn_node_apply_forward.1} parent=0 // pred_check
    _
  $region23: #{gcn_node_apply_forward.1} parent=0 // pred_check_branch
    %1509 = sbr.rel (0) target = $region25
  $region24: #{gcn_node_apply_forward.1} parent=0 // pred_region
    _
  $region25: #{gcn_node_apply_forward.1} parent=0 // pred_fallthru
    _
  // Predicated region
  $region26: #{gcn_node_apply_forward.1} parent=0 // pred_check
    _
  $region27: #{gcn_node_apply_forward.1} parent=0 // pred_check_branch
    %1511 = sbr.rel (0) target = $region29
  $region28: #{gcn_node_apply_forward.1} parent=0 // pred_region
    _
  $region29: #{gcn_node_apply_forward.1} parent=0 // pred_fallthru
    _

</llo_original>
